<compile_context>
chip_gen: v5e
topology: v5e:2x2
jax: 0.10.0
libtpu: 0.0.40
codegen_flags: <defaults>
</compile_context>

<pallas_src>
import numpy as np
import jax
import jax.numpy as jnp
from jax import lax
from jax.experimental import pallas as pl
from jax.experimental.pallas import tpu as pltpu

EPS = 2.2204e-16          # normalize_graph / L1-norm eps (matches torch)
COS_EPS = 1e-08           # cosine_dist per-element eps (matches torch)
NEG_BIG = -9000000000000000.0
NUM_NEG = 10


# ----------------------------------------------------------------- kernel ---

def _natsumi_kernel(x_ref, ai_ref, w_ref, b_ref, permsT_ref, att_ref):
    n = x_ref.shape[0]
    hdim = w_ref.shape[1]

    # --- prepare_data: per-row L1 normalization of the features (EUP recip) ---
    x = x_ref[...]
    inv_l1 = pl.reciprocal(
        jnp.maximum(jnp.sum(jnp.abs(x), axis=1, keepdims=True), 0.0) + EPS,
        approx=True)
    xn = x * inv_l1

    # --- normalize_graph(A_I): D^-1/2 A D^-1/2 (EUP rsqrt) ---
    a_i = ai_ref[...]
    d = lax.rsqrt(jnp.maximum(jnp.sum(a_i, axis=-1, keepdims=True), 0.0) + EPS)
    a_norm = d * a_i * d.T                                    # f32, reused for gate

    # --- stand-in GRLC encoder pre-propagation features ---
    # TODO(synk): GRLC definition unavailable; h = relu(A_norm @ (xn @ W + b)).
    h0 = jnp.dot(xn, w_ref[...], preferred_element_type=jnp.float32) + b_ref[...]
    h0_b = h0.astype(jnp.bfloat16)

    # --- assemble wide operand [h0 | h0[perm_0] | ... | h0[perm_9] | 0-pad] ---
    # The row gather h0[perm_i] is done in-register as an exact one-hot MXU
    # matmul P_i @ h0 (P_i built from iota/compare on the int32 perm column),
    # so no dynamic gather and no HBM materialization of the negatives.
    col_iota = lax.broadcasted_iota(jnp.int32, (n, n), 1)
    permsT = permsT_ref[...]                                  # (N, NUM_NEG) int32
    blocks = [h0_b]
    for i in range(NUM_NEG):
        perm_col = permsT[:, i:i + 1]                         # (N, 1) sublane-oriented
        p_i = (col_iota == perm_col).astype(jnp.bfloat16)     # one-hot perm matrix
        blocks.append(
            jnp.dot(p_i, h0_b, preferred_element_type=jnp.float32)
            .astype(jnp.bfloat16))
    nb = NUM_NEG + 1                                          # anchor + negatives
    if 128 % hdim == 0:
        # pad the wide width up to a multiple of 128 lanes (full MXU passes)
        nb_tot = ((nb * hdim + 127) // 128) * (128 // hdim)
    else:
        nb_tot = nb
    for _ in range(nb_tot - nb):
        blocks.append(jnp.zeros((n, hdim), jnp.bfloat16))
    wide0 = jnp.concatenate(blocks, axis=1)                   # (N, wp) bf16
    wp = nb_tot * hdim

    # --- one wide bf16 propagation (anchor + all negatives), f32 accumulation ---
    h_all = jnp.maximum(
        jnp.dot(a_norm.astype(jnp.bfloat16), wide0,
                preferred_element_type=jnp.float32), 0.0)     # (N, wp) f32
    h_a = h_all[:, :hdim]                                     # anchor embedding

    # --- diagonal cosines via MXU segment sums (no per-block XLU reductions) ---
    row = lax.broadcasted_iota(jnp.int32, (wp, nb), 0)
    col = lax.broadcasted_iota(jnp.int32, (wp, nb), 1)
    sel = ((row >= col * hdim) & (row < (col + 1) * hdim)).astype(jnp.float32)
    ha_tiled = jnp.tile(h_a, (1, nb_tot))                     # (N, wp)
    numer = jnp.dot(h_all * ha_tiled, sel,
                    preferred_element_type=jnp.float32)       # (N, nb) dot(h_a, h_k)
    sq = jnp.dot(h_all * h_all, sel,
                 preferred_element_type=jnp.float32)          # (N, nb) ||h_k||^2
    # torch cosine_dist adds 1e-8 per element inside the sum -> + hdim*1e-8
    inv_norm = lax.rsqrt(sq + hdim * COS_EPS)                 # (N, nb) f32
    inv_na = inv_norm[:, 0:1]                                 # anchor 1/||h_a||
    mean_cos = (jnp.sum(numer[:, 1:] * inv_norm[:, 1:], axis=1, keepdims=True)
                * inv_na * (1.0 / NUM_NEG))                   # (N, 1)

    # --- s_a = cosine_dist(h_a, h_a): contract last dims directly on the MXU ---
    ha_b = h_a.astype(jnp.bfloat16)
    up_aa = lax.dot_general(ha_b, ha_b, (((1,), (1,)), ((), ())),
                            preferred_element_type=jnp.float32)
    s_a = up_aa * (inv_na * inv_na.T)

    # --- S[i, j] = mean_cos[j] - s_a[i, j]  (torch expand_as broadcasts rows) ---
    S = mean_cos.T - s_a
    attention = jnp.where(S < 0.0,
                          jnp.where(a_norm > 0.0, 1.0, NEG_BIG),
                          NEG_BIG)

    # --- normalize_graph(attention) ---
    da = lax.rsqrt(
        jnp.maximum(jnp.sum(attention, axis=-1, keepdims=True), 0.0) + EPS)
    att_ref[...] = da * attention * da.T


# --------------------------------------------------------------- wrappers ---

def _natsumi_fused_call(x_flat, a_i, w, b, perms_t):
    n = x_flat.shape[0]
    # TODO(synk): whole-array VMEM blocks are right at this toy size; row-tile
    # with a grid + two-pass attention normalization before scaling N.
    vmem = pl.BlockSpec(memory_space=pltpu.MemorySpace.VMEM)
    return pl.pallas_call(
        _natsumi_kernel,
        out_shape=jax.ShapeDtypeStruct((n, n), jnp.float32),
        in_specs=[vmem, vmem, vmem, vmem, vmem],
        out_specs=vmem,
    )(x_flat, a_i, w, b, perms_t)


@jax.jit
def _natsumi_device(x_flat, edge_index, w, b, perms_t):
    n = x_flat.shape[0]
    # dense adjacency from edge_index (torch: sparse ones -> to_dense, + I)
    a = jnp.zeros((n, n), jnp.float32).at[edge_index[0], edge_index[1]].add(1.0)
    a_i = a + jnp.eye(n, dtype=jnp.float32)
    return _natsumi_fused_call(x_flat, a_i, w, b, perms_t)


# ------------------------------------------------------------------ model ---

class NatsumiPallas:
    def __init__(self, num_steps, num_agents, num_features, dim, dim_x,
                 dropout, key):
        assert num_features == dim, "reshape(-1, hidden_dim) requires F == dim"
        self.num_steps = num_steps
        self.num_agents = num_agents
        self.num_nodes = num_steps * num_agents
        self.hidden_dim = dim
        self.num_neg = NUM_NEG
        k_w, k_perm = jax.random.split(key)
        # deterministic synthetic parameters for the stand-in encoder
        self.W = jax.random.normal(k_w, (num_features, dim), jnp.float32) * 0.1
        self.b = jnp.zeros((1, dim), jnp.float32)
        # deterministic negative-sample permutations (gen_negative_samples),
        # stored transposed (N, num_neg) so a perm column is sublane-oriented
        keys = jax.random.split(k_perm, self.num_neg)
        perms = jnp.stack(
            [jax.random.permutation(k, self.num_nodes) for k in keys])
        self.perms_t = perms.T.astype(jnp.int32)
        # dim_x / dropout unused: eval-mode stand-in encoder, no training step.

    def forward(self, x, edge_index):
        num_steps, real_num_agents, _ = x.shape
        D = self.hidden_dim

        # --- prepare_data: pad agents + flatten (static shapes, host-side) ---
        xp = jnp.pad(x.astype(jnp.float32),
                     ((0, 0), (0, self.num_agents - real_num_agents), (0, 0)))
        xf = xp.reshape(-1, D)

        attention_N = _natsumi_device(xf, jnp.asarray(edge_index),
                                      self.W, self.b, self.perms_t)
        attention_N = jax.block_until_ready(attention_N)

        # --- output_edge_index: data-dependent nonzero() done host-side ---
        att = np.asarray(jax.device_get(attention_N))
        rows, cols = np.nonzero(att)
        ei = np.stack([rows, cols]).astype(np.int64)
        ei = ei[:, ei[0] < ei[1]]
        ei = ei[:, ei[1] < self.num_steps * real_num_agents]
        return ei, attention_N


# ------------------------------------------------------------------- main ---

if __name__ == "__main__":
    num_steps, num_agents, real_num_agents = 8, 4, 3
    dim = 32                      # num_features == dim (see prepare_data reshape)
    N = num_steps * num_agents

    key = jax.random.PRNGKey(0)
    k_x, k_model = jax.random.split(key)

    x = jax.random.normal(k_x, (num_steps, real_num_agents, dim), jnp.float32)

    # deterministic symmetric chain over all node ids
    src = jnp.arange(N - 1, dtype=jnp.int32)
    dst = jnp.arange(1, N, dtype=jnp.int32)
    edge_index = jnp.stack([jnp.concatenate([src, dst]),
                            jnp.concatenate([dst, src])])

    model = NatsumiPallas(num_steps=num_steps, num_agents=num_agents,
                          num_features=dim, dim=dim, dim_x=dim,
                          dropout=0.1, key=k_model)

    out_edge_index, att_n = model.forward(x, edge_index)
    jax.block_until_ready(att_n)
    assert out_edge_index.shape[0] == 2
    assert att_n.shape == (N, N)
    print("KERNEL_OK")
</pallas_src>

<mosaic_0001>
module attributes {stable_mosaic.version = 11 : i64} {
  func.func @_natsumi_kernel(%arg0: memref<32x32xf32, #tpu.memory_space<vmem>>, %arg1: memref<32x32xf32, #tpu.memory_space<vmem>>, %arg2: memref<32x32xf32, #tpu.memory_space<vmem>>, %arg3: memref<1x32xf32, #tpu.memory_space<vmem>>, %arg4: memref<32x10xi32, #tpu.memory_space<vmem>>, %arg5: memref<32x32xf32, #tpu.memory_space<vmem>>) attributes {dimension_semantics = [], scalar_prefetch = 0 : i64, scratch_operands = 0 : i64, tpu.core_type = #tpu.core_type<tc>} {
    %c0 = arith.constant 0 : index
    %c0_0 = arith.constant 0 : index
    %0 = vector.load %arg0[%c0, %c0_0] : memref<32x32xf32, #tpu.memory_space<vmem>>, vector<32x32xf32>
    %1 = math.absf %0 : vector<32x32xf32>
    %cst = arith.constant dense<0.000000e+00> : vector<32xf32>
    %2 = vector.multi_reduction <add>, %1, %cst [1] : vector<32x32xf32> to vector<32xf32>
    %3 = vector.shape_cast %2 : vector<32xf32> to vector<32x1xf32>
    %cst_1 = arith.constant 0.000000e+00 : f32
    %4 = vector.broadcast %cst_1 : f32 to vector<32x1xf32>
    %5 = arith.maximumf %3, %4 : vector<32x1xf32>
    %cst_2 = arith.constant 2.220400e-16 : f32
    %6 = vector.broadcast %cst_2 : f32 to vector<32x1xf32>
    %7 = arith.addf %5, %6 : vector<32x1xf32>
    %8 = tpu.reciprocal %7 {approx = true} : vector<32x1xf32> -> vector<32x1xf32>
    %9 = vector.broadcast %8 : vector<32x1xf32> to vector<32x32xf32>
    %10 = arith.mulf %0, %9 : vector<32x32xf32>
    %c0_3 = arith.constant 0 : index
    %c0_4 = arith.constant 0 : index
    %11 = vector.load %arg1[%c0_3, %c0_4] : memref<32x32xf32, #tpu.memory_space<vmem>>, vector<32x32xf32>
    %cst_5 = arith.constant dense<0.000000e+00> : vector<32xf32>
    %12 = vector.multi_reduction <add>, %11, %cst_5 [1] : vector<32x32xf32> to vector<32xf32>
    %13 = vector.shape_cast %12 : vector<32xf32> to vector<32x1xf32>
    %cst_6 = arith.constant 0.000000e+00 : f32
    %14 = vector.broadcast %cst_6 : f32 to vector<32x1xf32>
    %15 = arith.maximumf %13, %14 : vector<32x1xf32>
    %cst_7 = arith.constant 2.220400e-16 : f32
    %16 = vector.broadcast %cst_7 : f32 to vector<32x1xf32>
    %17 = arith.addf %15, %16 : vector<32x1xf32>
    %18 = math.rsqrt %17 : vector<32x1xf32>
    %19 = vector.broadcast %18 : vector<32x1xf32> to vector<32x32xf32>
    %20 = arith.mulf %19, %11 : vector<32x32xf32>
    %21 = tpu.transpose %18, [1, 0] : vector<32x1xf32> -> vector<1x32xf32>
    %22 = vector.broadcast %21 : vector<1x32xf32> to vector<32x32xf32>
    %23 = arith.mulf %20, %22 : vector<32x32xf32>
    %c0_8 = arith.constant 0 : index
    %c0_9 = arith.constant 0 : index
    %24 = vector.load %arg2[%c0_8, %c0_9] : memref<32x32xf32, #tpu.memory_space<vmem>>, vector<32x32xf32>
    %cst_10 = arith.constant dense<0.000000e+00> : vector<32x32xf32>
    %25 = tpu.matmul %10, %24, %cst_10 {dimension_numbers = #tpu.dot_dimension_numbers<[1], [0], [0], [1], [0, 0, 1, 1], [], []>} : vector<32x32xf32>, vector<32x32xf32>, vector<32x32xf32> -> vector<32x32xf32>
    %c0_11 = arith.constant 0 : index
    %c0_12 = arith.constant 0 : index
    %26 = vector.load %arg3[%c0_11, %c0_12] : memref<1x32xf32, #tpu.memory_space<vmem>>, vector<1x32xf32>
    %27 = vector.broadcast %26 : vector<1x32xf32> to vector<32x32xf32>
    %28 = arith.addf %25, %27 : vector<32x32xf32>
    %29 = arith.truncf %28 : vector<32x32xf32> to vector<32x32xbf16>
    %30 = tpu.iota {dimensions = array<i32: 1>} : vector<32x32xi32>
    %c0_13 = arith.constant 0 : index
    %c0_14 = arith.constant 0 : index
    %31 = vector.load %arg4[%c0_13, %c0_14] : memref<32x10xi32, #tpu.memory_space<vmem>>, vector<32x10xi32>
    %32 = vector.extract_strided_slice %31 {offsets = [0, 0], sizes = [32, 1], strides = [1, 1]} : vector<32x10xi32> to vector<32x1xi32>
    %33 = vector.broadcast %32 : vector<32x1xi32> to vector<32x32xi32>
    %34 = arith.cmpi eq, %30, %33 : vector<32x32xi32>
    %35 = arith.extui %34 : vector<32x32xi1> to vector<32x32xi32>
    %36 = arith.sitofp %35 : vector<32x32xi32> to vector<32x32xf32>
    %37 = arith.truncf %36 : vector<32x32xf32> to vector<32x32xbf16>
    %cst_15 = arith.constant dense<0.000000e+00> : vector<32x32xf32>
    %38 = tpu.matmul %37, %29, %cst_15 {dimension_numbers = #tpu.dot_dimension_numbers<[1], [0], [0], [1], [0, 0, 1, 1], [], []>} : vector<32x32xbf16>, vector<32x32xbf16>, vector<32x32xf32> -> vector<32x32xf32>
    %39 = arith.truncf %38 : vector<32x32xf32> to vector<32x32xbf16>
    %40 = vector.extract_strided_slice %31 {offsets = [0, 1], sizes = [32, 1], strides = [1, 1]} : vector<32x10xi32> to vector<32x1xi32>
    %41 = vector.broadcast %40 : vector<32x1xi32> to vector<32x32xi32>
    %42 = arith.cmpi eq, %30, %41 : vector<32x32xi32>
    %43 = arith.extui %42 : vector<32x32xi1> to vector<32x32xi32>
    %44 = arith.sitofp %43 : vector<32x32xi32> to vector<32x32xf32>
    %45 = arith.truncf %44 : vector<32x32xf32> to vector<32x32xbf16>
    %cst_16 = arith.constant dense<0.000000e+00> : vector<32x32xf32>
    %46 = tpu.matmul %45, %29, %cst_16 {dimension_numbers = #tpu.dot_dimension_numbers<[1], [0], [0], [1], [0, 0, 1, 1], [], []>} : vector<32x32xbf16>, vector<32x32xbf16>, vector<32x32xf32> -> vector<32x32xf32>
    %47 = arith.truncf %46 : vector<32x32xf32> to vector<32x32xbf16>
    %48 = vector.extract_strided_slice %31 {offsets = [0, 2], sizes = [32, 1], strides = [1, 1]} : vector<32x10xi32> to vector<32x1xi32>
    %49 = vector.broadcast %48 : vector<32x1xi32> to vector<32x32xi32>
    %50 = arith.cmpi eq, %30, %49 : vector<32x32xi32>
    %51 = arith.extui %50 : vector<32x32xi1> to vector<32x32xi32>
    %52 = arith.sitofp %51 : vector<32x32xi32> to vector<32x32xf32>
    %53 = arith.truncf %52 : vector<32x32xf32> to vector<32x32xbf16>
    %cst_17 = arith.constant dense<0.000000e+00> : vector<32x32xf32>
    %54 = tpu.matmul %53, %29, %cst_17 {dimension_numbers = #tpu.dot_dimension_numbers<[1], [0], [0], [1], [0, 0, 1, 1], [], []>} : vector<32x32xbf16>, vector<32x32xbf16>, vector<32x32xf32> -> vector<32x32xf32>
    %55 = arith.truncf %54 : vector<32x32xf32> to vector<32x32xbf16>
    %56 = vector.extract_strided_slice %31 {offsets = [0, 3], sizes = [32, 1], strides = [1, 1]} : vector<32x10xi32> to vector<32x1xi32>
    %57 = vector.broadcast %56 : vector<32x1xi32> to vector<32x32xi32>
    %58 = arith.cmpi eq, %30, %57 : vector<32x32xi32>
    %59 = arith.extui %58 : vector<32x32xi1> to vector<32x32xi32>
    %60 = arith.sitofp %59 : vector<32x32xi32> to vector<32x32xf32>
    %61 = arith.truncf %60 : vector<32x32xf32> to vector<32x32xbf16>
    %cst_18 = arith.constant dense<0.000000e+00> : vector<32x32xf32>
    %62 = tpu.matmul %61, %29, %cst_18 {dimension_numbers = #tpu.dot_dimension_numbers<[1], [0], [0], [1], [0, 0, 1, 1], [], []>} : vector<32x32xbf16>, vector<32x32xbf16>, vector<32x32xf32> -> vector<32x32xf32>
    %63 = arith.truncf %62 : vector<32x32xf32> to vector<32x32xbf16>
    %64 = vector.extract_strided_slice %31 {offsets = [0, 4], sizes = [32, 1], strides = [1, 1]} : vector<32x10xi32> to vector<32x1xi32>
    %65 = vector.broadcast %64 : vector<32x1xi32> to vector<32x32xi32>
    %66 = arith.cmpi eq, %30, %65 : vector<32x32xi32>
    %67 = arith.extui %66 : vector<32x32xi1> to vector<32x32xi32>
    %68 = arith.sitofp %67 : vector<32x32xi32> to vector<32x32xf32>
    %69 = arith.truncf %68 : vector<32x32xf32> to vector<32x32xbf16>
    %cst_19 = arith.constant dense<0.000000e+00> : vector<32x32xf32>
    %70 = tpu.matmul %69, %29, %cst_19 {dimension_numbers = #tpu.dot_dimension_numbers<[1], [0], [0], [1], [0, 0, 1, 1], [], []>} : vector<32x32xbf16>, vector<32x32xbf16>, vector<32x32xf32> -> vector<32x32xf32>
    %71 = arith.truncf %70 : vector<32x32xf32> to vector<32x32xbf16>
    %72 = vector.extract_strided_slice %31 {offsets = [0, 5], sizes = [32, 1], strides = [1, 1]} : vector<32x10xi32> to vector<32x1xi32>
    %73 = vector.broadcast %72 : vector<32x1xi32> to vector<32x32xi32>
    %74 = arith.cmpi eq, %30, %73 : vector<32x32xi32>
    %75 = arith.extui %74 : vector<32x32xi1> to vector<32x32xi32>
    %76 = arith.sitofp %75 : vector<32x32xi32> to vector<32x32xf32>
    %77 = arith.truncf %76 : vector<32x32xf32> to vector<32x32xbf16>
    %cst_20 = arith.constant dense<0.000000e+00> : vector<32x32xf32>
    %78 = tpu.matmul %77, %29, %cst_20 {dimension_numbers = #tpu.dot_dimension_numbers<[1], [0], [0], [1], [0, 0, 1, 1], [], []>} : vector<32x32xbf16>, vector<32x32xbf16>, vector<32x32xf32> -> vector<32x32xf32>
    %79 = arith.truncf %78 : vector<32x32xf32> to vector<32x32xbf16>
    %80 = vector.extract_strided_slice %31 {offsets = [0, 6], sizes = [32, 1], strides = [1, 1]} : vector<32x10xi32> to vector<32x1xi32>
    %81 = vector.broadcast %80 : vector<32x1xi32> to vector<32x32xi32>
    %82 = arith.cmpi eq, %30, %81 : vector<32x32xi32>
    %83 = arith.extui %82 : vector<32x32xi1> to vector<32x32xi32>
    %84 = arith.sitofp %83 : vector<32x32xi32> to vector<32x32xf32>
    %85 = arith.truncf %84 : vector<32x32xf32> to vector<32x32xbf16>
    %cst_21 = arith.constant dense<0.000000e+00> : vector<32x32xf32>
    %86 = tpu.matmul %85, %29, %cst_21 {dimension_numbers = #tpu.dot_dimension_numbers<[1], [0], [0], [1], [0, 0, 1, 1], [], []>} : vector<32x32xbf16>, vector<32x32xbf16>, vector<32x32xf32> -> vector<32x32xf32>
    %87 = arith.truncf %86 : vector<32x32xf32> to vector<32x32xbf16>
    %88 = vector.extract_strided_slice %31 {offsets = [0, 7], sizes = [32, 1], strides = [1, 1]} : vector<32x10xi32> to vector<32x1xi32>
    %89 = vector.broadcast %88 : vector<32x1xi32> to vector<32x32xi32>
    %90 = arith.cmpi eq, %30, %89 : vector<32x32xi32>
    %91 = arith.extui %90 : vector<32x32xi1> to vector<32x32xi32>
    %92 = arith.sitofp %91 : vector<32x32xi32> to vector<32x32xf32>
    %93 = arith.truncf %92 : vector<32x32xf32> to vector<32x32xbf16>
    %cst_22 = arith.constant dense<0.000000e+00> : vector<32x32xf32>
    %94 = tpu.matmul %93, %29, %cst_22 {dimension_numbers = #tpu.dot_dimension_numbers<[1], [0], [0], [1], [0, 0, 1, 1], [], []>} : vector<32x32xbf16>, vector<32x32xbf16>, vector<32x32xf32> -> vector<32x32xf32>
    %95 = arith.truncf %94 : vector<32x32xf32> to vector<32x32xbf16>
    %96 = vector.extract_strided_slice %31 {offsets = [0, 8], sizes = [32, 1], strides = [1, 1]} : vector<32x10xi32> to vector<32x1xi32>
    %97 = vector.broadcast %96 : vector<32x1xi32> to vector<32x32xi32>
    %98 = arith.cmpi eq, %30, %97 : vector<32x32xi32>
    %99 = arith.extui %98 : vector<32x32xi1> to vector<32x32xi32>
    %100 = arith.sitofp %99 : vector<32x32xi32> to vector<32x32xf32>
    %101 = arith.truncf %100 : vector<32x32xf32> to vector<32x32xbf16>
    %cst_23 = arith.constant dense<0.000000e+00> : vector<32x32xf32>
    %102 = tpu.matmul %101, %29, %cst_23 {dimension_numbers = #tpu.dot_dimension_numbers<[1], [0], [0], [1], [0, 0, 1, 1], [], []>} : vector<32x32xbf16>, vector<32x32xbf16>, vector<32x32xf32> -> vector<32x32xf32>
    %103 = arith.truncf %102 : vector<32x32xf32> to vector<32x32xbf16>
    %104 = vector.extract_strided_slice %31 {offsets = [0, 9], sizes = [32, 1], strides = [1, 1]} : vector<32x10xi32> to vector<32x1xi32>
    %105 = vector.broadcast %104 : vector<32x1xi32> to vector<32x32xi32>
    %106 = arith.cmpi eq, %30, %105 : vector<32x32xi32>
    %107 = arith.extui %106 : vector<32x32xi1> to vector<32x32xi32>
    %108 = arith.sitofp %107 : vector<32x32xi32> to vector<32x32xf32>
    %109 = arith.truncf %108 : vector<32x32xf32> to vector<32x32xbf16>
    %cst_24 = arith.constant dense<0.000000e+00> : vector<32x32xf32>
    %110 = tpu.matmul %109, %29, %cst_24 {dimension_numbers = #tpu.dot_dimension_numbers<[1], [0], [0], [1], [0, 0, 1, 1], [], []>} : vector<32x32xbf16>, vector<32x32xbf16>, vector<32x32xf32> -> vector<32x32xf32>
    %111 = arith.truncf %110 : vector<32x32xf32> to vector<32x32xbf16>
    %cst_25 = arith.constant 0.000000e+00 : bf16
    %112 = vector.broadcast %cst_25 : bf16 to vector<32x32xbf16>
    %113 = tpu.concatenate %29, %39, %47, %55, %63, %71, %79, %87, %95, %103, %111, %112 in 1 : vector<32x32xbf16>, vector<32x32xbf16>, vector<32x32xbf16>, vector<32x32xbf16>, vector<32x32xbf16>, vector<32x32xbf16>, vector<32x32xbf16>, vector<32x32xbf16>, vector<32x32xbf16>, vector<32x32xbf16>, vector<32x32xbf16>, vector<32x32xbf16> -> vector<32x384xbf16>
    %114 = arith.truncf %23 : vector<32x32xf32> to vector<32x32xbf16>
    %cst_26 = arith.constant dense<0.000000e+00> : vector<32x384xf32>
    %115 = tpu.matmul %114, %113, %cst_26 {dimension_numbers = #tpu.dot_dimension_numbers<[1], [0], [0], [1], [0, 0, 1, 1], [], []>} : vector<32x32xbf16>, vector<32x384xbf16>, vector<32x384xf32> -> vector<32x384xf32>
    %cst_27 = arith.constant 0.000000e+00 : f32
    %116 = vector.broadcast %cst_27 : f32 to vector<32x384xf32>
    %117 = arith.maximumf %115, %116 : vector<32x384xf32>
    %118 = vector.extract_strided_slice %117 {offsets = [0, 0], sizes = [32, 32], strides = [1, 1]} : vector<32x384xf32> to vector<32x32xf32>
    %119 = tpu.iota {dimensions = array<i32: 0>} : vector<384x11xi32>
    %120 = tpu.iota {dimensions = array<i32: 1>} : vector<384x11xi32>
    %c32_i32 = arith.constant 32 : i32
    %121 = vector.broadcast %c32_i32 : i32 to vector<384x11xi32>
    %122 = arith.muli %120, %121 : vector<384x11xi32>
    %123 = arith.cmpi sge, %119, %122 : vector<384x11xi32>
    %c1_i32 = arith.constant 1 : i32
    %124 = vector.broadcast %c1_i32 : i32 to vector<384x11xi32>
    %125 = arith.addi %120, %124 : vector<384x11xi32>
    %c32_i32_28 = arith.constant 32 : i32
    %126 = vector.broadcast %c32_i32_28 : i32 to vector<384x11xi32>
    %127 = arith.muli %125, %126 : vector<384x11xi32>
    %128 = arith.cmpi slt, %119, %127 : vector<384x11xi32>
    %129 = arith.andi %123, %128 : vector<384x11xi1>
    %130 = arith.extui %129 : vector<384x11xi1> to vector<384x11xi32>
    %131 = arith.sitofp %130 : vector<384x11xi32> to vector<384x11xf32>
    %132 = tpu.concatenate %118, %118, %118, %118, %118, %118, %118, %118, %118, %118, %118, %118 in 1 : vector<32x32xf32>, vector<32x32xf32>, vector<32x32xf32>, vector<32x32xf32>, vector<32x32xf32>, vector<32x32xf32>, vector<32x32xf32>, vector<32x32xf32>, vector<32x32xf32>, vector<32x32xf32>, vector<32x32xf32>, vector<32x32xf32> -> vector<32x384xf32>
    %133 = arith.mulf %117, %132 : vector<32x384xf32>
    %cst_29 = arith.constant dense<0.000000e+00> : vector<32x11xf32>
    %134 = tpu.matmul %133, %131, %cst_29 {dimension_numbers = #tpu.dot_dimension_numbers<[1], [0], [0], [1], [0, 0, 1, 1], [], []>} : vector<32x384xf32>, vector<384x11xf32>, vector<32x11xf32> -> vector<32x11xf32>
    %135 = arith.mulf %117, %117 : vector<32x384xf32>
    %cst_30 = arith.constant dense<0.000000e+00> : vector<32x11xf32>
    %136 = tpu.matmul %135, %131, %cst_30 {dimension_numbers = #tpu.dot_dimension_numbers<[1], [0], [0], [1], [0, 0, 1, 1], [], []>} : vector<32x384xf32>, vector<384x11xf32>, vector<32x11xf32> -> vector<32x11xf32>
    %cst_31 = arith.constant 3.200000e-07 : f32
    %137 = vector.broadcast %cst_31 : f32 to vector<32x11xf32>
    %138 = arith.addf %136, %137 : vector<32x11xf32>
    %139 = math.rsqrt %138 : vector<32x11xf32>
    %140 = vector.extract_strided_slice %139 {offsets = [0, 0], sizes = [32, 1], strides = [1, 1]} : vector<32x11xf32> to vector<32x1xf32>
    %141 = vector.extract_strided_slice %134 {offsets = [0, 1], sizes = [32, 10], strides = [1, 1]} : vector<32x11xf32> to vector<32x10xf32>
    %142 = vector.extract_strided_slice %139 {offsets = [0, 1], sizes = [32, 10], strides = [1, 1]} : vector<32x11xf32> to vector<32x10xf32>
    %143 = arith.mulf %141, %142 : vector<32x10xf32>
    %cst_32 = arith.constant dense<0.000000e+00> : vector<32xf32>
    %144 = vector.multi_reduction <add>, %143, %cst_32 [1] : vector<32x10xf32> to vector<32xf32>
    %145 = vector.shape_cast %144 : vector<32xf32> to vector<32x1xf32>
    %146 = arith.mulf %145, %140 : vector<32x1xf32>
    %cst_33 = arith.constant 1.000000e-01 : f32
    %147 = vector.broadcast %cst_33 : f32 to vector<32x1xf32>
    %148 = arith.mulf %146, %147 : vector<32x1xf32>
    %149 = arith.truncf %118 : vector<32x32xf32> to vector<32x32xbf16>
    %cst_34 = arith.constant dense<0.000000e+00> : vector<32x32xf32>
    %150 = tpu.matmul %149, %149, %cst_34 {dimension_numbers = #tpu.dot_dimension_numbers<[1], [1], [0], [0], [0, 0, 1, 0], [], []>} : vector<32x32xbf16>, vector<32x32xbf16>, vector<32x32xf32> -> vector<32x32xf32>
    %151 = tpu.transpose %140, [1, 0] : vector<32x1xf32> -> vector<1x32xf32>
    %152 = vector.broadcast %140 : vector<32x1xf32> to vector<32x32xf32>
    %153 = vector.broadcast %151 : vector<1x32xf32> to vector<32x32xf32>
    %154 = arith.mulf %152, %153 : vector<32x32xf32>
    %155 = arith.mulf %150, %154 : vector<32x32xf32>
    %156 = tpu.transpose %148, [1, 0] : vector<32x1xf32> -> vector<1x32xf32>
    %157 = vector.broadcast %156 : vector<1x32xf32> to vector<32x32xf32>
    %158 = arith.subf %157, %155 : vector<32x32xf32>
    %cst_35 = arith.constant 0.000000e+00 : f32
    %159 = vector.broadcast %cst_35 : f32 to vector<32x32xf32>
    %160 = arith.cmpf olt, %158, %159 : vector<32x32xf32>
    %cst_36 = arith.constant 0.000000e+00 : f32
    %161 = vector.broadcast %cst_36 : f32 to vector<32x32xf32>
    %162 = arith.cmpf ogt, %23, %161 : vector<32x32xf32>
    %cst_37 = arith.constant 1.000000e+00 : f32
    %cst_38 = arith.constant -9.000000e+15 : f32
    %163 = vector.broadcast %cst_37 : f32 to vector<32x32xf32>
    %164 = vector.broadcast %cst_38 : f32 to vector<32x32xf32>
    %165 = arith.select %162, %163, %164 : vector<32x32xi1>, vector<32x32xf32>
    %cst_39 = arith.constant -9.000000e+15 : f32
    %166 = vector.broadcast %cst_39 : f32 to vector<32x32xf32>
    %167 = arith.select %160, %165, %166 : vector<32x32xi1>, vector<32x32xf32>
    %cst_40 = arith.constant dense<0.000000e+00> : vector<32xf32>
    %168 = vector.multi_reduction <add>, %167, %cst_40 [1] : vector<32x32xf32> to vector<32xf32>
    %169 = vector.shape_cast %168 : vector<32xf32> to vector<32x1xf32>
    %cst_41 = arith.constant 0.000000e+00 : f32
    %170 = vector.broadcast %cst_41 : f32 to vector<32x1xf32>
    %171 = arith.maximumf %169, %170 : vector<32x1xf32>
    %cst_42 = arith.constant 2.220400e-16 : f32
    %172 = vector.broadcast %cst_42 : f32 to vector<32x1xf32>
    %173 = arith.addf %171, %172 : vector<32x1xf32>
    %174 = math.rsqrt %173 : vector<32x1xf32>
    %175 = vector.broadcast %174 : vector<32x1xf32> to vector<32x32xf32>
    %176 = arith.mulf %175, %167 : vector<32x32xf32>
    %177 = tpu.transpose %174, [1, 0] : vector<32x1xf32> -> vector<1x32xf32>
    %178 = vector.broadcast %177 : vector<1x32xf32> to vector<32x32xf32>
    %179 = arith.mulf %176, %178 : vector<32x32xf32>
    %c0_43 = arith.constant 0 : index
    %c0_44 = arith.constant 0 : index
    %180 = vector.load %arg5[%c0_43, %c0_44] : memref<32x32xf32, #tpu.memory_space<vmem>>, vector<32x32xf32>
    tpu.vector_store %arg5[%c0_43, %c0_44], %179 {strides = array<i32>} : memref<32x32xf32, #tpu.memory_space<vmem>>, vector<32x32xf32>,
    return
  }
}

</mosaic_0001>

<llo_original>
// kernel: _natsumi_device.1
$region0: #{_natsumi_device.1}
  #allocation0 [shape = 'u32[]', space=smem, size = 0x4, offset = 0x4, fixed_abs, tag = 'smem constant byte address 0x4 - core index']
  #allocation1 [shape = 'u32[72,128]{1,0:T(1,128)}', space=vmem, size = 0x9000, scoped, tag = 'internal scratch']
  %s0 = inlined_call_operand.vmem [shape: f32[32,32], index: 0, kind: input, shape index: {}]
  %s1 = inlined_call_operand.vmem [shape: f32[32,32], index: 1, kind: input, shape index: {}]
  %s2 = inlined_call_operand.vmem [shape: f32[32,32], index: 2, kind: input, shape index: {}]
  %s3 = inlined_call_operand.vmem [shape: f32[1,32], index: 3, kind: input, shape index: {}]
  %s4 = inlined_call_operand.vmem [shape: s32[32,10], index: 4, kind: input, shape index: {}]
  %s5 = inlined_call_operand.hbm [shape: f32[32,32], index: 5, kind: output, shape index: {}]
  %s6 = sld [smem:[#allocation0]]
  $region30: #{_natsumi_device.1} parent=0
    _
  %s8 = ssub.s32 1, %s6
  %s9 = scalar_select 0, %s8, %s6
  $region1: #{_natsumi_device.1} parent=0
    #allocation2 [shape = 'u8[16384]{0}', space=vmem, size = 0x4000, scoped, tag = 'output window, operand 0, single buffered']
    #allocation3 [shape = 's32[1]{0}', space=sflag, size = 0x4, scoped, tag = 'scoped memory for _natsumi_device.1']
    %10 = vsyncpa [#allocation3], 0
    // Predicated region
    $region2: #{_natsumi_device.1} parent=1 // pred_check
      _
    $region3: #{_natsumi_device.1} parent=1 // pred_check_branch
      %12 = sbr.rel (0) target = $region5
    $region4: #{_natsumi_device.1} parent=1 // pred_region
      _
    $region5: #{_natsumi_device.1} parent=1 // pred_fallthru
      _
    // Predicated region
    $region6: #{_natsumi_device.1} parent=1 // pred_check
      _
    $region7: #{_natsumi_device.1} parent=1 // pred_check_branch
      %14 = sbr.rel (0) target = $region9
    $region8: #{_natsumi_device.1} parent=1 // pred_region
      _
    $region9: #{_natsumi_device.1} parent=1 // pred_fallthru
      _
    // Predicated region
    $region10: #{_natsumi_device.1} parent=1 // pred_check
      _
    $region11: #{_natsumi_device.1} parent=1 // pred_check_branch
      %16 = sbr.rel (0) target = $region13
    $region12: #{_natsumi_device.1} parent=1 // pred_region
      _
    $region13: #{_natsumi_device.1} parent=1 // pred_fallthru
      _
    // Predicated region
    $region14: #{_natsumi_device.1} parent=1 // pred_check
      _
    $region15: #{_natsumi_device.1} parent=1 // pred_check_branch
      %18 = sbr.rel (0) target = $region17
    $region16: #{_natsumi_device.1} parent=1 // pred_region
      _
    $region17: #{_natsumi_device.1} parent=1 // pred_fallthru
      _
    // Predicated region
    $region18: #{_natsumi_device.1} parent=1 // pred_check
      _
    $region19: #{_natsumi_device.1} parent=1 // pred_check_branch
      %20 = sbr.rel (0) target = $region21
    $region20: #{_natsumi_device.1} parent=1 // pred_region
      _
    $region21: #{_natsumi_device.1} parent=1 // pred_fallthru
      _
    %v22 = vld [vmem:[%s0] sm:$0xff]
    %v23 = vld [vmem:[%s0 + $0x8] sm:$0xff]
    %v24 = vld [vmem:[%s0 + $0x10] sm:$0xff]
    %v25 = vld [vmem:[%s0 + $0x18] sm:$0xff]
    %v26 = vand.u32 2147483647, %v22
    %v27 = vand.u32 2147483647, %v23
    %v28 = vand.u32 2147483647, %v24
    %v29 = vand.u32 2147483647, %v25
    %vm30 = vcmask 261120
    %v31 = vsel %vm30, %v26, 0.0
    %32 = vadd.xlane.f32.xlu0 %v31
    %v33 = vpop.xlane.xlu0 %32
    %v34 = vsel %vm30, %v27, 0.0
    %35 = vadd.xlane.f32.xlu0 %v34
    %v36 = vpop.xlane.xlu0 %35
    %v37 = vsel %vm30, %v28, 0.0
    %38 = vadd.xlane.f32.xlu0 %v37
    %v39 = vpop.xlane.xlu0 %38
    %v40 = vsel %vm30, %v29, 0.0
    %41 = vadd.xlane.f32.xlu0 %v40
    %v42 = vpop.xlane.xlu0 %41
    %v43 = vmax.f32 %v33, 0.0
    %v44 = vmax.f32 %v36, 0.0
    %v45 = vmax.f32 %v39, 0.0
    %v46 = vmax.f32 %v42, 0.0
    %v47 = vadd.f32 %v43, 2.2204e-16
    %v48 = vadd.f32 %v44, 2.2204e-16
    %v49 = vadd.f32 %v45, 2.2204e-16
    %v50 = vadd.f32 %v46, 2.2204e-16
    %v51 = vrcp.pop %v47
    %v52 = vrcp.pop %v48
    %v53 = vrcp.pop %v49
    %v54 = vrcp.pop %v50
    %v55 = vmul.f32 %v22, %v51
    %v56 = vmul.f32 %v23, %v52
    %v57 = vmul.f32 %v24, %v53
    %v58 = vmul.f32 %v25, %v54
    %v59 = vld [vmem:[%s1] sm:$0xff]
    %v60 = vld [vmem:[%s1 + $0x8] sm:$0xff]
    %v61 = vld [vmem:[%s1 + $0x10] sm:$0xff]
    %v62 = vld [vmem:[%s1 + $0x18] sm:$0xff]
    %v63 = vsel %vm30, %v59, 0.0
    %64 = vadd.xlane.f32.xlu0 %v63
    %v65 = vpop.xlane.xlu0 %64
    %v66 = vsel %vm30, %v60, 0.0
    %67 = vadd.xlane.f32.xlu0 %v66
    %v68 = vpop.xlane.xlu0 %67
    %v69 = vsel %vm30, %v61, 0.0
    %70 = vadd.xlane.f32.xlu0 %v69
    %v71 = vpop.xlane.xlu0 %70
    %v72 = vsel %vm30, %v62, 0.0
    %73 = vadd.xlane.f32.xlu0 %v72
    %v74 = vpop.xlane.xlu0 %73
    %v75 = vmax.f32 %v65, 0.0
    %v76 = vmax.f32 %v68, 0.0
    %v77 = vmax.f32 %v71, 0.0
    %v78 = vmax.f32 %v74, 0.0
    %v79 = vadd.f32 %v75, 2.2204e-16
    %v80 = vadd.f32 %v76, 2.2204e-16
    %v81 = vadd.f32 %v77, 2.2204e-16
    %v82 = vadd.f32 %v78, 2.2204e-16
    %v83 = vrsqrt.pop %v79
    %v84 = vmul.f32 %v83, %v79
    %v85 = vmul.f32 %v84, %v83
    %v86 = vmul.f32 0.5, %v85
    %v87 = vsub.f32 1.5, %v86
    %v88 = vmul.f32 %v83, %v87
    %vm89 = vweird.f32 %v79
    %vm90 = vweird.f32 %v83
    %vm91 = vmor %vm89, %vm90
    %v92 = vsel %vm91, %v83, %v88
    %v93 = vrsqrt.pop %v80
    %v94 = vmul.f32 %v93, %v80
    %v95 = vmul.f32 %v94, %v93
    %v96 = vmul.f32 0.5, %v95
    %v97 = vsub.f32 1.5, %v96
    %v98 = vmul.f32 %v93, %v97
    %vm99 = vweird.f32 %v80
    %vm100 = vweird.f32 %v93
    %vm101 = vmor %vm99, %vm100
    %v102 = vsel %vm101, %v93, %v98
    %v103 = vrsqrt.pop %v81
    %v104 = vmul.f32 %v103, %v81
    %v105 = vmul.f32 %v104, %v103
    %v106 = vmul.f32 0.5, %v105
    %v107 = vsub.f32 1.5, %v106
    %v108 = vmul.f32 %v103, %v107
    %vm109 = vweird.f32 %v81
    %vm110 = vweird.f32 %v103
    %vm111 = vmor %vm109, %vm110
    %v112 = vsel %vm111, %v103, %v108
    %v113 = vrsqrt.pop %v82
    %v114 = vmul.f32 %v113, %v82
    %v115 = vmul.f32 %v114, %v113
    %v116 = vmul.f32 0.5, %v115
    %v117 = vsub.f32 1.5, %v116
    %v118 = vmul.f32 %v113, %v117
    %vm119 = vweird.f32 %v82
    %vm120 = vweird.f32 %v113
    %vm121 = vmor %vm119, %vm120
    %v122 = vsel %vm121, %v113, %v118
    %v123 = vmul.f32 %v92, %v59
    %v124 = vmul.f32 %v102, %v60
    %v125 = vmul.f32 %v112, %v61
    %v126 = vmul.f32 %v122, %v62
    %127 = vxpose.xlu0.b32.start [1/16] %v92, 128
    %128 = vxpose.xlu0.b32.cont [2/16] %v102, 128
    %129 = vxpose.xlu0.b32.cont [3/16] %v112, 128
    %130 = vxpose.xlu0.b32.cont [4/16] %v122, 128
    %131 = vxpose.xlu0.b32.cont [5/16] 0.0, 128
    %132 = vxpose.xlu0.b32.cont [6/16] 0.0, 128
    %133 = vxpose.xlu0.b32.cont [7/16] 0.0, 128
    %134 = vxpose.xlu0.b32.cont [8/16] 0.0, 128
    %135 = vxpose.xlu0.b32.cont [9/16] 0.0, 128
    %136 = vxpose.xlu0.b32.cont [10/16] 0.0, 128
    %137 = vxpose.xlu0.b32.cont [11/16] 0.0, 128
    %138 = vxpose.xlu0.b32.cont [12/16] 0.0, 128
    %139 = vxpose.xlu0.b32.cont [13/16] 0.0, 128
    %140 = vxpose.xlu0.b32.cont [14/16] 0.0, 128
    %141 = vxpose.xlu0.b32.cont [15/16] 0.0, 128
    %142 = vxpose.xlu0.b32.end [16/16] 0.0, 128
    %v143 = vpop.trf.xlu0
    %v144 = vpop.trf.xlu0
    %v145 = vpop.trf.xlu0
    %v146 = vpop.trf.xlu0
    %v147 = vpop.trf.xlu0
    %v148 = vpop.trf.xlu0
    %v149 = vpop.trf.xlu0
    %v150 = vpop.trf.xlu0
    %v151 = vpop.trf.xlu0
    %v152 = vpop.trf.xlu0
    %v153 = vpop.trf.xlu0
    %v154 = vpop.trf.xlu0
    %v155 = vpop.trf.xlu0
    %v156 = vpop.trf.xlu0
    %v157 = vpop.trf.xlu0
    %v158 = vpop.trf.xlu0
    %v159 = vperm.slane %v143, 0
    %v160 = vmul.f32 %v123, %v159
    %v161 = vmul.f32 %v124, %v159
    %v162 = vmul.f32 %v125, %v159
    %v163 = vmul.f32 %v126, %v159
    %v164 = vld [vmem:[%s2] sm:$0xff]
    %v165 = vld [vmem:[%s2 + $0x8] sm:$0xff]
    %v166 = vld [vmem:[%s2 + $0x10] sm:$0xff]
    %v167 = vld [vmem:[%s2 + $0x18] sm:$0xff]
    %v168 = vld [vmem:[%s3] sm:$0x1]
    %v170 = vperm.slane %v168, 0
    %v173 = vsel %vm30, %v55, 0
    %v176 = vsel %vm30, %v56, 0
    %v179 = vsel %vm30, %v57, 0
    %v182 = vsel %vm30, %v58, 0
    %184 = vmatpush.msra.mxu0 0.0
    %185 = vmatpush.msra.mxu0 0.0
    %186 = vmatpush.msra.mxu0 0.0
    %187 = vmatpush.msra.mxu0 0.0
    %188 = vmatpush.msra.mxu0 0.0
    %189 = vmatpush.msra.mxu0 0.0
    %190 = vmatpush.msra.mxu0 0.0
    %191 = vmatpush.msra.mxu0 0.0
    %192 = vmatpush.msra.mxu0 0.0
    %193 = vmatpush.msra.mxu0 0.0
    %194 = vmatpush.msra.mxu0 0.0
    %195 = vmatpush.msra.mxu0 0.0
    %196 = vmatpush.msra.mxu0 %v167
    %197 = vmatpush.msra.mxu0 %v166
    %198 = vmatpush.msra.mxu0 %v165
    %199 = vmatpush.msra.mxu0 %v164
    %200 = vmatmul.f32.gmra.mxu0 %v173
    %v201 = vpop.f32.mrf.mxu0
    %v202 = vadd.f32 %v170, %v201
    %203 = vmatmul.f32.gmra.mxu0 %v176
    %v204 = vpop.f32.mrf.mxu0
    %v205 = vadd.f32 %v170, %v204
    %206 = vmatmul.f32.gmra.mxu0 %v179
    %v207 = vpop.f32.mrf.mxu0
    %v208 = vadd.f32 %v170, %v207
    %209 = vmatmul.f32.gmra.mxu0 %v182
    %v210 = vpop.f32.mrf.mxu0
    %v211 = vadd.f32 %v170, %v210
    %212 = vdwg.mxu0
    %v213 = vpack.c.bf16 %v202, %v202
    %v214 = vpack.c.bf16 %v205, %v205
    %v215 = vpack.c.bf16 %v208, %v208
    %v216 = vpack.c.bf16 %v211, %v211
    %v217 = vlaneseq
    %v218 = vand.u32 %v217, 127
    %v219 = vld [vmem:[%s4] sm:$0xff]
    %v220 = vld [vmem:[%s4 + $0x8] sm:$0xff]
    %v221 = vld [vmem:[%s4 + $0x10] sm:$0xff]
    %v222 = vld [vmem:[%s4 + $0x18] sm:$0xff]
    %223 = vset.pattern.permute.xlu0 0
    %224 = vperm.xlu0 %223, %v219
    %v225 = vpop.permute.xlu0 %224
    %226 = vset.pattern.permute.xlu0 0
    %227 = vperm.xlu0 %226, %v220
    %v228 = vpop.permute.xlu0 %227
    %229 = vset.pattern.permute.xlu0 0
    %230 = vperm.xlu0 %229, %v221
    %v231 = vpop.permute.xlu0 %230
    %232 = vset.pattern.permute.xlu0 0
    %233 = vperm.xlu0 %232, %v222
    %v234 = vpop.permute.xlu0 %233
    %vm235 = vcmp.eq.s32.totalorder %v218, %v225
    %vm236 = vcmp.eq.s32.totalorder %v218, %v228
    %vm237 = vcmp.eq.s32.totalorder %v218, %v231
    %vm238 = vcmp.eq.s32.totalorder %v218, %v234
    %v239 = vsel %vm235, 1, 0
    %v240 = vsel %vm236, 1, 0
    %v241 = vsel %vm237, 1, 0
    %v242 = vsel %vm238, 1, 0
    %v243 = vcvt.s32.f32 %v239
    %v244 = vcvt.s32.f32 %v240
    %v245 = vcvt.s32.f32 %v241
    %v246 = vcvt.s32.f32 %v242
    %v247 = vpack.c.bf16 %v244, %v243
    %v248 = vpack.c.bf16 %v246, %v245
    %v253 = vunpack.c.l.b16 %v213
    %v254 = vunpack.c.l.b16 %v214
    %v255 = vunpack.c.l.b16 %v215
    %v256 = vunpack.c.l.b16 %v216
    %v257 = vpack.c.b16 %v254, %v253
    %v258 = vpack.c.b16 %v256, %v255
    %v262 = vsel %vm30, %v247, 0
    %v265 = vsel %vm30, %v248, 0
    %267 = vmatpush.bf16.msra.mxu0 0
    %268 = vmatpush.bf16.msra.mxu0 0
    %269 = vmatpush.bf16.msra.mxu0 0
    %270 = vmatpush.bf16.msra.mxu0 0
    %271 = vmatpush.bf16.msra.mxu0 0
    %272 = vmatpush.bf16.msra.mxu0 0
    %273 = vmatpush.bf16.msra.mxu0 %v258
    %274 = vmatpush.bf16.msra.mxu0 %v257
    %275 = vmatmul.bf16.gmra.mxu0 %v262
    %v276 = vpop.f32.mrf.mxu0
    %v277 = vadd.f32 0.0, %v276
    %v278 = vpop.f32.mrf.mxu0
    %v279 = vadd.f32 0.0, %v278
    %280 = vmatmul.bf16.gmra.mxu0 %v265
    %v281 = vpop.f32.mrf.mxu0
    %v282 = vadd.f32 0.0, %v281
    %v283 = vpop.f32.mrf.mxu0
    %v284 = vadd.f32 0.0, %v283
    %285 = vdwg.mxu0
    %v286 = vpack.c.bf16 %v277, %v277
    %v287 = vpack.c.bf16 %v279, %v279
    %v288 = vpack.c.bf16 %v282, %v282
    %v289 = vpack.c.bf16 %v284, %v284
    %290 = vset.pattern.permute.xlu0 1
    %291 = vperm.xlu0 %290, %v219
    %v292 = vpop.permute.xlu0 %291
    %293 = vset.pattern.permute.xlu0 1
    %294 = vperm.xlu0 %293, %v220
    %v295 = vpop.permute.xlu0 %294
    %296 = vset.pattern.permute.xlu0 1
    %297 = vperm.xlu0 %296, %v221
    %v298 = vpop.permute.xlu0 %297
    %299 = vset.pattern.permute.xlu0 1
    %300 = vperm.xlu0 %299, %v222
    %v301 = vpop.permute.xlu0 %300
    %vm302 = vcmp.eq.s32.totalorder %v218, %v292
    %vm303 = vcmp.eq.s32.totalorder %v218, %v295
    %vm304 = vcmp.eq.s32.totalorder %v218, %v298
    %vm305 = vcmp.eq.s32.totalorder %v218, %v301
    %v306 = vsel %vm302, 1, 0
    %v307 = vsel %vm303, 1, 0
    %v308 = vsel %vm304, 1, 0
    %v309 = vsel %vm305, 1, 0
    %v310 = vcvt.s32.f32 %v306
    %v311 = vcvt.s32.f32 %v307
    %v312 = vcvt.s32.f32 %v308
    %v313 = vcvt.s32.f32 %v309
    %v314 = vpack.c.bf16 %v311, %v310
    %v315 = vpack.c.bf16 %v313, %v312
    %v317 = vsel %vm30, %v314, 0
    %v320 = vsel %vm30, %v315, 0
    %322 = vmatpush.bf16.msra.mxu0 0
    %323 = vmatpush.bf16.msra.mxu0 0
    %324 = vmatpush.bf16.msra.mxu0 0
    %325 = vmatpush.bf16.msra.mxu0 0
    %326 = vmatpush.bf16.msra.mxu0 0
    %327 = vmatpush.bf16.msra.mxu0 0
    %328 = vmatpush.bf16.msra.mxu0 %v258
    %329 = vmatpush.bf16.msra.mxu0 %v257
    %330 = vmatmul.bf16.gmra.mxu0 %v317
    %v331 = vpop.f32.mrf.mxu0
    %v332 = vadd.f32 0.0, %v331
    %v333 = vpop.f32.mrf.mxu0
    %v334 = vadd.f32 0.0, %v333
    %335 = vmatmul.bf16.gmra.mxu0 %v320
    %v336 = vpop.f32.mrf.mxu0
    %v337 = vadd.f32 0.0, %v336
    %v338 = vpop.f32.mrf.mxu0
    %v339 = vadd.f32 0.0, %v338
    %340 = vdwg.mxu0
    %v341 = vpack.c.bf16 %v332, %v332
    %v342 = vpack.c.bf16 %v334, %v334
    %v343 = vpack.c.bf16 %v337, %v337
    %v344 = vpack.c.bf16 %v339, %v339
    %345 = vset.pattern.permute.xlu0 2
    %346 = vperm.xlu0 %345, %v219
    %v347 = vpop.permute.xlu0 %346
    %348 = vset.pattern.permute.xlu0 2
    %349 = vperm.xlu0 %348, %v220
    %v350 = vpop.permute.xlu0 %349
    %351 = vset.pattern.permute.xlu0 2
    %352 = vperm.xlu0 %351, %v221
    %v353 = vpop.permute.xlu0 %352
    %354 = vset.pattern.permute.xlu0 2
    %355 = vperm.xlu0 %354, %v222
    %v356 = vpop.permute.xlu0 %355
    %vm357 = vcmp.eq.s32.totalorder %v218, %v347
    %vm358 = vcmp.eq.s32.totalorder %v218, %v350
    %vm359 = vcmp.eq.s32.totalorder %v218, %v353
    %vm360 = vcmp.eq.s32.totalorder %v218, %v356
    %v361 = vsel %vm357, 1, 0
    %v362 = vsel %vm358, 1, 0
    %v363 = vsel %vm359, 1, 0
    %v364 = vsel %vm360, 1, 0
    %v365 = vcvt.s32.f32 %v361
    %v366 = vcvt.s32.f32 %v362
    %v367 = vcvt.s32.f32 %v363
    %v368 = vcvt.s32.f32 %v364
    %v369 = vpack.c.bf16 %v366, %v365
    %v370 = vpack.c.bf16 %v368, %v367
    %v372 = vsel %vm30, %v369, 0
    %v375 = vsel %vm30, %v370, 0
    %377 = vmatpush.bf16.msra.mxu0 0
    %378 = vmatpush.bf16.msra.mxu0 0
    %379 = vmatpush.bf16.msra.mxu0 0
    %380 = vmatpush.bf16.msra.mxu0 0
    %381 = vmatpush.bf16.msra.mxu0 0
    %382 = vmatpush.bf16.msra.mxu0 0
    %383 = vmatpush.bf16.msra.mxu0 %v258
    %384 = vmatpush.bf16.msra.mxu0 %v257
    %385 = vmatmul.bf16.gmra.mxu0 %v372
    %v386 = vpop.f32.mrf.mxu0
    %v387 = vadd.f32 0.0, %v386
    %v388 = vpop.f32.mrf.mxu0
    %v389 = vadd.f32 0.0, %v388
    %390 = vmatmul.bf16.gmra.mxu0 %v375
    %v391 = vpop.f32.mrf.mxu0
    %v392 = vadd.f32 0.0, %v391
    %v393 = vpop.f32.mrf.mxu0
    %v394 = vadd.f32 0.0, %v393
    %395 = vdwg.mxu0
    %v396 = vpack.c.bf16 %v387, %v387
    %v397 = vpack.c.bf16 %v389, %v389
    %v398 = vpack.c.bf16 %v392, %v392
    %v399 = vpack.c.bf16 %v394, %v394
    %400 = vset.pattern.permute.xlu0 3
    %401 = vperm.xlu0 %400, %v219
    %v402 = vpop.permute.xlu0 %401
    %403 = vset.pattern.permute.xlu0 3
    %404 = vperm.xlu0 %403, %v220
    %v405 = vpop.permute.xlu0 %404
    %406 = vset.pattern.permute.xlu0 3
    %407 = vperm.xlu0 %406, %v221
    %v408 = vpop.permute.xlu0 %407
    %409 = vset.pattern.permute.xlu0 3
    %410 = vperm.xlu0 %409, %v222
    %v411 = vpop.permute.xlu0 %410
    %vm412 = vcmp.eq.s32.totalorder %v218, %v402
    %vm413 = vcmp.eq.s32.totalorder %v218, %v405
    %vm414 = vcmp.eq.s32.totalorder %v218, %v408
    %vm415 = vcmp.eq.s32.totalorder %v218, %v411
    %v416 = vsel %vm412, 1, 0
    %v417 = vsel %vm413, 1, 0
    %v418 = vsel %vm414, 1, 0
    %v419 = vsel %vm415, 1, 0
    %v420 = vcvt.s32.f32 %v416
    %v421 = vcvt.s32.f32 %v417
    %v422 = vcvt.s32.f32 %v418
    %v423 = vcvt.s32.f32 %v419
    %v424 = vpack.c.bf16 %v421, %v420
    %v425 = vpack.c.bf16 %v423, %v422
    %v427 = vsel %vm30, %v424, 0
    %v430 = vsel %vm30, %v425, 0
    %432 = vmatpush.bf16.msra.mxu0 0
    %433 = vmatpush.bf16.msra.mxu0 0
    %434 = vmatpush.bf16.msra.mxu0 0
    %435 = vmatpush.bf16.msra.mxu0 0
    %436 = vmatpush.bf16.msra.mxu0 0
    %437 = vmatpush.bf16.msra.mxu0 0
    %438 = vmatpush.bf16.msra.mxu0 %v258
    %439 = vmatpush.bf16.msra.mxu0 %v257
    %440 = vmatmul.bf16.gmra.mxu0 %v427
    %v441 = vpop.f32.mrf.mxu0
    %v442 = vadd.f32 0.0, %v441
    %v443 = vpop.f32.mrf.mxu0
    %v444 = vadd.f32 0.0, %v443
    %445 = vmatmul.bf16.gmra.mxu0 %v430
    %v446 = vpop.f32.mrf.mxu0
    %v447 = vadd.f32 0.0, %v446
    %v448 = vpop.f32.mrf.mxu0
    %v449 = vadd.f32 0.0, %v448
    %450 = vdwg.mxu0
    %v451 = vpack.c.bf16 %v442, %v442
    %v452 = vpack.c.bf16 %v444, %v444
    %v453 = vpack.c.bf16 %v447, %v447
    %v454 = vpack.c.bf16 %v449, %v449
    %455 = vset.pattern.permute.xlu0 4
    %456 = vperm.xlu0 %455, %v219
    %v457 = vpop.permute.xlu0 %456
    %458 = vset.pattern.permute.xlu0 4
    %459 = vperm.xlu0 %458, %v220
    %v460 = vpop.permute.xlu0 %459
    %461 = vset.pattern.permute.xlu0 4
    %462 = vperm.xlu0 %461, %v221
    %v463 = vpop.permute.xlu0 %462
    %464 = vset.pattern.permute.xlu0 4
    %465 = vperm.xlu0 %464, %v222
    %v466 = vpop.permute.xlu0 %465
    %vm467 = vcmp.eq.s32.totalorder %v218, %v457
    %vm468 = vcmp.eq.s32.totalorder %v218, %v460
    %vm469 = vcmp.eq.s32.totalorder %v218, %v463
    %vm470 = vcmp.eq.s32.totalorder %v218, %v466
    %v471 = vsel %vm467, 1, 0
    %v472 = vsel %vm468, 1, 0
    %v473 = vsel %vm469, 1, 0
    %v474 = vsel %vm470, 1, 0
    %v475 = vcvt.s32.f32 %v471
    %v476 = vcvt.s32.f32 %v472
    %v477 = vcvt.s32.f32 %v473
    %v478 = vcvt.s32.f32 %v474
    %v479 = vpack.c.bf16 %v476, %v475
    %v480 = vpack.c.bf16 %v478, %v477
    %v482 = vsel %vm30, %v479, 0
    %v485 = vsel %vm30, %v480, 0
    %487 = vmatpush.bf16.msra.mxu0 0
    %488 = vmatpush.bf16.msra.mxu0 0
    %489 = vmatpush.bf16.msra.mxu0 0
    %490 = vmatpush.bf16.msra.mxu0 0
    %491 = vmatpush.bf16.msra.mxu0 0
    %492 = vmatpush.bf16.msra.mxu0 0
    %493 = vmatpush.bf16.msra.mxu0 %v258
    %494 = vmatpush.bf16.msra.mxu0 %v257
    %495 = vmatmul.bf16.gmra.mxu0 %v482
    %v496 = vpop.f32.mrf.mxu0
    %v497 = vadd.f32 0.0, %v496
    %v498 = vpop.f32.mrf.mxu0
    %v499 = vadd.f32 0.0, %v498
    %500 = vmatmul.bf16.gmra.mxu0 %v485
    %v501 = vpop.f32.mrf.mxu0
    %v502 = vadd.f32 0.0, %v501
    %v503 = vpop.f32.mrf.mxu0
    %v504 = vadd.f32 0.0, %v503
    %505 = vdwg.mxu0
    %v506 = vpack.c.bf16 %v497, %v497
    %v507 = vpack.c.bf16 %v499, %v499
    %v508 = vpack.c.bf16 %v502, %v502
    %v509 = vpack.c.bf16 %v504, %v504
    %510 = vset.pattern.permute.xlu0 5
    %511 = vperm.xlu0 %510, %v219
    %v512 = vpop.permute.xlu0 %511
    %513 = vset.pattern.permute.xlu0 5
    %514 = vperm.xlu0 %513, %v220
    %v515 = vpop.permute.xlu0 %514
    %516 = vset.pattern.permute.xlu0 5
    %517 = vperm.xlu0 %516, %v221
    %v518 = vpop.permute.xlu0 %517
    %519 = vset.pattern.permute.xlu0 5
    %520 = vperm.xlu0 %519, %v222
    %v521 = vpop.permute.xlu0 %520
    %vm522 = vcmp.eq.s32.totalorder %v218, %v512
    %vm523 = vcmp.eq.s32.totalorder %v218, %v515
    %vm524 = vcmp.eq.s32.totalorder %v218, %v518
    %vm525 = vcmp.eq.s32.totalorder %v218, %v521
    %v526 = vsel %vm522, 1, 0
    %v527 = vsel %vm523, 1, 0
    %v528 = vsel %vm524, 1, 0
    %v529 = vsel %vm525, 1, 0
    %v530 = vcvt.s32.f32 %v526
    %v531 = vcvt.s32.f32 %v527
    %v532 = vcvt.s32.f32 %v528
    %v533 = vcvt.s32.f32 %v529
    %v534 = vpack.c.bf16 %v531, %v530
    %v535 = vpack.c.bf16 %v533, %v532
    %v537 = vsel %vm30, %v534, 0
    %v540 = vsel %vm30, %v535, 0
    %542 = vmatpush.bf16.msra.mxu0 0
    %543 = vmatpush.bf16.msra.mxu0 0
    %544 = vmatpush.bf16.msra.mxu0 0
    %545 = vmatpush.bf16.msra.mxu0 0
    %546 = vmatpush.bf16.msra.mxu0 0
    %547 = vmatpush.bf16.msra.mxu0 0
    %548 = vmatpush.bf16.msra.mxu0 %v258
    %549 = vmatpush.bf16.msra.mxu0 %v257
    %550 = vmatmul.bf16.gmra.mxu0 %v537
    %v551 = vpop.f32.mrf.mxu0
    %v552 = vadd.f32 0.0, %v551
    %v553 = vpop.f32.mrf.mxu0
    %v554 = vadd.f32 0.0, %v553
    %555 = vmatmul.bf16.gmra.mxu0 %v540
    %v556 = vpop.f32.mrf.mxu0
    %v557 = vadd.f32 0.0, %v556
    %v558 = vpop.f32.mrf.mxu0
    %v559 = vadd.f32 0.0, %v558
    %560 = vdwg.mxu0
    %v561 = vpack.c.bf16 %v552, %v552
    %v562 = vpack.c.bf16 %v554, %v554
    %v563 = vpack.c.bf16 %v557, %v557
    %v564 = vpack.c.bf16 %v559, %v559
    %565 = vset.pattern.permute.xlu0 6
    %566 = vperm.xlu0 %565, %v219
    %v567 = vpop.permute.xlu0 %566
    %568 = vset.pattern.permute.xlu0 6
    %569 = vperm.xlu0 %568, %v220
    %v570 = vpop.permute.xlu0 %569
    %571 = vset.pattern.permute.xlu0 6
    %572 = vperm.xlu0 %571, %v221
    %v573 = vpop.permute.xlu0 %572
    %574 = vset.pattern.permute.xlu0 6
    %575 = vperm.xlu0 %574, %v222
    %v576 = vpop.permute.xlu0 %575
    %vm577 = vcmp.eq.s32.totalorder %v218, %v567
    %vm578 = vcmp.eq.s32.totalorder %v218, %v570
    %vm579 = vcmp.eq.s32.totalorder %v218, %v573
    %vm580 = vcmp.eq.s32.totalorder %v218, %v576
    %v581 = vsel %vm577, 1, 0
    %v582 = vsel %vm578, 1, 0
    %v583 = vsel %vm579, 1, 0
    %v584 = vsel %vm580, 1, 0
    %v585 = vcvt.s32.f32 %v581
    %v586 = vcvt.s32.f32 %v582
    %v587 = vcvt.s32.f32 %v583
    %v588 = vcvt.s32.f32 %v584
    %v589 = vpack.c.bf16 %v586, %v585
    %v590 = vpack.c.bf16 %v588, %v587
    %v592 = vsel %vm30, %v589, 0
    %v595 = vsel %vm30, %v590, 0
    %597 = vmatpush.bf16.msra.mxu0 0
    %598 = vmatpush.bf16.msra.mxu0 0
    %599 = vmatpush.bf16.msra.mxu0 0
    %600 = vmatpush.bf16.msra.mxu0 0
    %601 = vmatpush.bf16.msra.mxu0 0
    %602 = vmatpush.bf16.msra.mxu0 0
    %603 = vmatpush.bf16.msra.mxu0 %v258
    %604 = vmatpush.bf16.msra.mxu0 %v257
    %605 = vmatmul.bf16.gmra.mxu0 %v592
    %v606 = vpop.f32.mrf.mxu0
    %v607 = vadd.f32 0.0, %v606
    %v608 = vpop.f32.mrf.mxu0
    %v609 = vadd.f32 0.0, %v608
    %610 = vmatmul.bf16.gmra.mxu0 %v595
    %v611 = vpop.f32.mrf.mxu0
    %v612 = vadd.f32 0.0, %v611
    %v613 = vpop.f32.mrf.mxu0
    %v614 = vadd.f32 0.0, %v613
    %615 = vdwg.mxu0
    %v616 = vpack.c.bf16 %v607, %v607
    %v617 = vpack.c.bf16 %v609, %v609
    %v618 = vpack.c.bf16 %v612, %v612
    %v619 = vpack.c.bf16 %v614, %v614
    %620 = vset.pattern.permute.xlu0 7
    %621 = vperm.xlu0 %620, %v219
    %v622 = vpop.permute.xlu0 %621
    %623 = vset.pattern.permute.xlu0 7
    %624 = vperm.xlu0 %623, %v220
    %v625 = vpop.permute.xlu0 %624
    %626 = vset.pattern.permute.xlu0 7
    %627 = vperm.xlu0 %626, %v221
    %v628 = vpop.permute.xlu0 %627
    %629 = vset.pattern.permute.xlu0 7
    %630 = vperm.xlu0 %629, %v222
    %v631 = vpop.permute.xlu0 %630
    %vm632 = vcmp.eq.s32.totalorder %v218, %v622
    %vm633 = vcmp.eq.s32.totalorder %v218, %v625
    %vm634 = vcmp.eq.s32.totalorder %v218, %v628
    %vm635 = vcmp.eq.s32.totalorder %v218, %v631
    %v636 = vsel %vm632, 1, 0
    %v637 = vsel %vm633, 1, 0
    %v638 = vsel %vm634, 1, 0
    %v639 = vsel %vm635, 1, 0
    %v640 = vcvt.s32.f32 %v636
    %v641 = vcvt.s32.f32 %v637
    %v642 = vcvt.s32.f32 %v638
    %v643 = vcvt.s32.f32 %v639
    %v644 = vpack.c.bf16 %v641, %v640
    %v645 = vpack.c.bf16 %v643, %v642
    %v647 = vsel %vm30, %v644, 0
    %v650 = vsel %vm30, %v645, 0
    %652 = vmatpush.bf16.msra.mxu0 0
    %653 = vmatpush.bf16.msra.mxu0 0
    %654 = vmatpush.bf16.msra.mxu0 0
    %655 = vmatpush.bf16.msra.mxu0 0
    %656 = vmatpush.bf16.msra.mxu0 0
    %657 = vmatpush.bf16.msra.mxu0 0
    %658 = vmatpush.bf16.msra.mxu0 %v258
    %659 = vmatpush.bf16.msra.mxu0 %v257
    %660 = vmatmul.bf16.gmra.mxu0 %v647
    %v661 = vpop.f32.mrf.mxu0
    %v662 = vadd.f32 0.0, %v661
    %v663 = vpop.f32.mrf.mxu0
    %v664 = vadd.f32 0.0, %v663
    %665 = vmatmul.bf16.gmra.mxu0 %v650
    %v666 = vpop.f32.mrf.mxu0
    %v667 = vadd.f32 0.0, %v666
    %v668 = vpop.f32.mrf.mxu0
    %v669 = vadd.f32 0.0, %v668
    %670 = vdwg.mxu0
    %v671 = vpack.c.bf16 %v662, %v662
    %v672 = vpack.c.bf16 %v664, %v664
    %v673 = vpack.c.bf16 %v667, %v667
    %v674 = vpack.c.bf16 %v669, %v669
    %675 = vset.pattern.permute.xlu0 8
    %676 = vperm.xlu0 %675, %v219
    %v677 = vpop.permute.xlu0 %676
    %678 = vset.pattern.permute.xlu0 8
    %679 = vperm.xlu0 %678, %v220
    %v680 = vpop.permute.xlu0 %679
    %681 = vset.pattern.permute.xlu0 8
    %682 = vperm.xlu0 %681, %v221
    %v683 = vpop.permute.xlu0 %682
    %684 = vset.pattern.permute.xlu0 8
    %685 = vperm.xlu0 %684, %v222
    %v686 = vpop.permute.xlu0 %685
    %vm687 = vcmp.eq.s32.totalorder %v218, %v677
    %vm688 = vcmp.eq.s32.totalorder %v218, %v680
    %vm689 = vcmp.eq.s32.totalorder %v218, %v683
    %vm690 = vcmp.eq.s32.totalorder %v218, %v686
    %v691 = vsel %vm687, 1, 0
    %v692 = vsel %vm688, 1, 0
    %v693 = vsel %vm689, 1, 0
    %v694 = vsel %vm690, 1, 0
    %v695 = vcvt.s32.f32 %v691
    %v696 = vcvt.s32.f32 %v692
    %v697 = vcvt.s32.f32 %v693
    %v698 = vcvt.s32.f32 %v694
    %v699 = vpack.c.bf16 %v696, %v695
    %v700 = vpack.c.bf16 %v698, %v697
    %v702 = vsel %vm30, %v699, 0
    %v705 = vsel %vm30, %v700, 0
    %707 = vmatpush.bf16.msra.mxu0 0
    %708 = vmatpush.bf16.msra.mxu0 0
    %709 = vmatpush.bf16.msra.mxu0 0
    %710 = vmatpush.bf16.msra.mxu0 0
    %711 = vmatpush.bf16.msra.mxu0 0
    %712 = vmatpush.bf16.msra.mxu0 0
    %713 = vmatpush.bf16.msra.mxu0 %v258
    %714 = vmatpush.bf16.msra.mxu0 %v257
    %715 = vmatmul.bf16.gmra.mxu0 %v702
    %v716 = vpop.f32.mrf.mxu0
    %v717 = vadd.f32 0.0, %v716
    %v718 = vpop.f32.mrf.mxu0
    %v719 = vadd.f32 0.0, %v718
    %720 = vmatmul.bf16.gmra.mxu0 %v705
    %v721 = vpop.f32.mrf.mxu0
    %v722 = vadd.f32 0.0, %v721
    %v723 = vpop.f32.mrf.mxu0
    %v724 = vadd.f32 0.0, %v723
    %725 = vdwg.mxu0
    %v726 = vpack.c.bf16 %v717, %v717
    %v727 = vpack.c.bf16 %v719, %v719
    %v728 = vpack.c.bf16 %v722, %v722
    %v729 = vpack.c.bf16 %v724, %v724
    %730 = vset.pattern.permute.xlu0 9
    %731 = vperm.xlu0 %730, %v219
    %v732 = vpop.permute.xlu0 %731
    %733 = vset.pattern.permute.xlu0 9
    %734 = vperm.xlu0 %733, %v220
    %v735 = vpop.permute.xlu0 %734
    %736 = vset.pattern.permute.xlu0 9
    %737 = vperm.xlu0 %736, %v221
    %v738 = vpop.permute.xlu0 %737
    %739 = vset.pattern.permute.xlu0 9
    %740 = vperm.xlu0 %739, %v222
    %v741 = vpop.permute.xlu0 %740
    %vm742 = vcmp.eq.s32.totalorder %v218, %v732
    %vm743 = vcmp.eq.s32.totalorder %v218, %v735
    %vm744 = vcmp.eq.s32.totalorder %v218, %v738
    %vm745 = vcmp.eq.s32.totalorder %v218, %v741
    %v746 = vsel %vm742, 1, 0
    %v747 = vsel %vm743, 1, 0
    %v748 = vsel %vm744, 1, 0
    %v749 = vsel %vm745, 1, 0
    %v750 = vcvt.s32.f32 %v746
    %v751 = vcvt.s32.f32 %v747
    %v752 = vcvt.s32.f32 %v748
    %v753 = vcvt.s32.f32 %v749
    %v754 = vpack.c.bf16 %v751, %v750
    %v755 = vpack.c.bf16 %v753, %v752
    %v757 = vsel %vm30, %v754, 0
    %v760 = vsel %vm30, %v755, 0
    %762 = vmatpush.bf16.msra.mxu0 0
    %763 = vmatpush.bf16.msra.mxu0 0
    %764 = vmatpush.bf16.msra.mxu0 0
    %765 = vmatpush.bf16.msra.mxu0 0
    %766 = vmatpush.bf16.msra.mxu0 0
    %767 = vmatpush.bf16.msra.mxu0 0
    %768 = vmatpush.bf16.msra.mxu0 %v258
    %769 = vmatpush.bf16.msra.mxu0 %v257
    %770 = vmatmul.bf16.gmra.mxu0 %v757
    %v771 = vpop.f32.mrf.mxu0
    %v772 = vadd.f32 0.0, %v771
    %v773 = vpop.f32.mrf.mxu0
    %v774 = vadd.f32 0.0, %v773
    %775 = vmatmul.bf16.gmra.mxu0 %v760
    %v776 = vpop.f32.mrf.mxu0
    %v777 = vadd.f32 0.0, %v776
    %v778 = vpop.f32.mrf.mxu0
    %v779 = vadd.f32 0.0, %v778
    %780 = vdwg.mxu0
    %v781 = vpack.c.bf16 %v772, %v772
    %v782 = vpack.c.bf16 %v774, %v774
    %v783 = vpack.c.bf16 %v777, %v777
    %v784 = vpack.c.bf16 %v779, %v779
    %v789 = vunpack.c.l.b16 %v286
    %v790 = vunpack.c.l.b16 %v287
    %v791 = vunpack.c.l.b16 %v288
    %v792 = vunpack.c.l.b16 %v289
    %v793 = vpack.c.b16 %v790, %v789
    %v794 = vpack.c.b16 %v792, %v791
    %795 = vrot.lane.b32.xlu0 %v793, 32
    %v796 = vpop.permute.xlu0 %795
    %797 = vrot.lane.b32.xlu0 %v794, 32
    %v798 = vpop.permute.xlu0 %797
    %v803 = vunpack.c.l.b16 %v341
    %v804 = vunpack.c.l.b16 %v342
    %v805 = vunpack.c.l.b16 %v343
    %v806 = vunpack.c.l.b16 %v344
    %v807 = vpack.c.b16 %v804, %v803
    %v808 = vpack.c.b16 %v806, %v805
    %809 = vrot.lane.b32.xlu0 %v807, 64
    %v810 = vpop.permute.xlu0 %809
    %811 = vrot.lane.b32.xlu0 %v808, 64
    %v812 = vpop.permute.xlu0 %811
    %v817 = vunpack.c.l.b16 %v396
    %v818 = vunpack.c.l.b16 %v397
    %v819 = vunpack.c.l.b16 %v398
    %v820 = vunpack.c.l.b16 %v399
    %v821 = vpack.c.b16 %v818, %v817
    %v822 = vpack.c.b16 %v820, %v819
    %823 = vrot.lane.b32.xlu0 %v821, 96
    %v824 = vpop.permute.xlu0 %823
    %825 = vrot.lane.b32.xlu0 %v822, 96
    %v826 = vpop.permute.xlu0 %825
    %v831 = vunpack.c.l.b16 %v451
    %v832 = vunpack.c.l.b16 %v452
    %v833 = vunpack.c.l.b16 %v453
    %v834 = vunpack.c.l.b16 %v454
    %v835 = vpack.c.b16 %v832, %v831
    %v836 = vpack.c.b16 %v834, %v833
    %v841 = vunpack.c.l.b16 %v506
    %v842 = vunpack.c.l.b16 %v507
    %v843 = vunpack.c.l.b16 %v508
    %v844 = vunpack.c.l.b16 %v509
    %v845 = vpack.c.b16 %v842, %v841
    %v846 = vpack.c.b16 %v844, %v843
    %847 = vrot.lane.b32.xlu0 %v845, 32
    %v848 = vpop.permute.xlu0 %847
    %849 = vrot.lane.b32.xlu0 %v846, 32
    %v850 = vpop.permute.xlu0 %849
    %v855 = vunpack.c.l.b16 %v561
    %v856 = vunpack.c.l.b16 %v562
    %v857 = vunpack.c.l.b16 %v563
    %v858 = vunpack.c.l.b16 %v564
    %v859 = vpack.c.b16 %v856, %v855
    %v860 = vpack.c.b16 %v858, %v857
    %861 = vrot.lane.b32.xlu0 %v859, 64
    %v862 = vpop.permute.xlu0 %861
    %863 = vrot.lane.b32.xlu0 %v860, 64
    %v864 = vpop.permute.xlu0 %863
    %v869 = vunpack.c.l.b16 %v616
    %v870 = vunpack.c.l.b16 %v617
    %v871 = vunpack.c.l.b16 %v618
    %v872 = vunpack.c.l.b16 %v619
    %v873 = vpack.c.b16 %v870, %v869
    %v874 = vpack.c.b16 %v872, %v871
    %875 = vrot.lane.b32.xlu0 %v873, 96
    %v876 = vpop.permute.xlu0 %875
    %877 = vrot.lane.b32.xlu0 %v874, 96
    %v878 = vpop.permute.xlu0 %877
    %v883 = vunpack.c.l.b16 %v671
    %v884 = vunpack.c.l.b16 %v672
    %v885 = vunpack.c.l.b16 %v673
    %v886 = vunpack.c.l.b16 %v674
    %v887 = vpack.c.b16 %v884, %v883
    %v888 = vpack.c.b16 %v886, %v885
    %v893 = vunpack.c.l.b16 %v726
    %v894 = vunpack.c.l.b16 %v727
    %v895 = vunpack.c.l.b16 %v728
    %v896 = vunpack.c.l.b16 %v729
    %v897 = vpack.c.b16 %v894, %v893
    %v898 = vpack.c.b16 %v896, %v895
    %899 = vrot.lane.b32.xlu0 %v897, 32
    %v900 = vpop.permute.xlu0 %899
    %901 = vrot.lane.b32.xlu0 %v898, 32
    %v902 = vpop.permute.xlu0 %901
    %v907 = vunpack.c.l.b16 %v781
    %v908 = vunpack.c.l.b16 %v782
    %v909 = vunpack.c.l.b16 %v783
    %v910 = vunpack.c.l.b16 %v784
    %v911 = vpack.c.b16 %v908, %v907
    %v912 = vpack.c.b16 %v910, %v909
    %913 = vrot.lane.b32.xlu0 %v911, 64
    %v914 = vpop.permute.xlu0 %913
    %915 = vrot.lane.b32.xlu0 %v912, 64
    %v916 = vpop.permute.xlu0 %915
    %v919 = vsel %vm30, %v257, %v796
    %v922 = vsel %vm30, %v258, %v798
    %vm923 = vcmask 523264
    %v925 = vsel %vm923, %v919, %v810
    %v927 = vsel %vm923, %v922, %v812
    %vm928 = vcmask 785408
    %v930 = vsel %vm928, %v925, %v824
    %v933 = vsel %vm928, %v927, %v826
    %v937 = vsel %vm30, %v835, %v848
    %v940 = vsel %vm30, %v836, %v850
    %v942 = vsel %vm923, %v937, %v862
    %v944 = vsel %vm923, %v940, %v864
    %v946 = vsel %vm928, %v942, %v876
    %v949 = vsel %vm928, %v944, %v878
    %v953 = vsel %vm30, %v887, %v900
    %v956 = vsel %vm30, %v888, %v902
    %v958 = vsel %vm923, %v953, %v914
    %v960 = vsel %vm923, %v956, %v916
    %v962 = vsel %vm928, %v958, 0
    %v964 = vsel %vm928, %v960, 0
    %v966 = vpack.c.bf16 %v161, %v160
    %v967 = vpack.c.bf16 %v163, %v162
    %v969 = vsel %vm30, %v966, 0
    %v972 = vsel %vm30, %v967, 0
    %974 = vmatpush.bf16.msra.mxu0 0
    %975 = vmatpush.bf16.msra.mxu0 0
    %976 = vmatpush.bf16.msra.mxu0 0
    %977 = vmatpush.bf16.msra.mxu0 0
    %978 = vmatpush.bf16.msra.mxu0 0
    %979 = vmatpush.bf16.msra.mxu0 0
    %980 = vmatpush.bf16.msra.mxu0 %v933
    %981 = vmatpush.bf16.msra.mxu0 %v930
    %982 = vmatmul.bf16.gmra.mxu0 %v969
    %v983 = vpop.f32.mrf.mxu0
    %v984 = vadd.f32 0.0, %v983
    %v985 = vpop.f32.mrf.mxu0
    %v986 = vadd.f32 0.0, %v985
    %987 = vmatmul.bf16.gmra.mxu0 %v972
    %v988 = vpop.f32.mrf.mxu0
    %v989 = vadd.f32 0.0, %v988
    %v990 = vpop.f32.mrf.mxu0
    %v991 = vadd.f32 0.0, %v990
    %992 = vdwg.mxu0
    %993 = vmatpush.bf16.msra.mxu0 0
    %994 = vmatpush.bf16.msra.mxu0 0
    %995 = vmatpush.bf16.msra.mxu0 0
    %996 = vmatpush.bf16.msra.mxu0 0
    %997 = vmatpush.bf16.msra.mxu0 0
    %998 = vmatpush.bf16.msra.mxu0 0
    %999 = vmatpush.bf16.msra.mxu0 %v949
    %1000 = vmatpush.bf16.msra.mxu0 %v946
    %1001 = vmatmul.bf16.gmra.mxu0 %v969
    %v1002 = vpop.f32.mrf.mxu0
    %v1003 = vadd.f32 0.0, %v1002
    %v1004 = vpop.f32.mrf.mxu0
    %v1005 = vadd.f32 0.0, %v1004
    %1006 = vmatmul.bf16.gmra.mxu0 %v972
    %v1007 = vpop.f32.mrf.mxu0
    %v1008 = vadd.f32 0.0, %v1007
    %v1009 = vpop.f32.mrf.mxu0
    %v1010 = vadd.f32 0.0, %v1009
    %1011 = vdwg.mxu0
    %1012 = vmatpush.bf16.msra.mxu0 0
    %1013 = vmatpush.bf16.msra.mxu0 0
    %1014 = vmatpush.bf16.msra.mxu0 0
    %1015 = vmatpush.bf16.msra.mxu0 0
    %1016 = vmatpush.bf16.msra.mxu0 0
    %1017 = vmatpush.bf16.msra.mxu0 0
    %1018 = vmatpush.bf16.msra.mxu0 %v964
    %1019 = vmatpush.bf16.msra.mxu0 %v962
    %1020 = vmatmul.bf16.gmra.mxu0 %v969
    %v1021 = vpop.f32.mrf.mxu0
    %v1022 = vadd.f32 0.0, %v1021
    %v1023 = vpop.f32.mrf.mxu0
    %v1024 = vadd.f32 0.0, %v1023
    %1025 = vmatmul.bf16.gmra.mxu0 %v972
    %v1026 = vpop.f32.mrf.mxu0
    %v1027 = vadd.f32 0.0, %v1026
    %v1028 = vpop.f32.mrf.mxu0
    %v1029 = vadd.f32 0.0, %v1028
    %1030 = vdwg.mxu0
    %v1031 = vmax.f32 %v984, 0.0
    %v1032 = vmax.f32 %v1003, 0.0
    %v1033 = vmax.f32 %v1022, 0.0
    %v1034 = vmax.f32 %v986, 0.0
    %v1035 = vmax.f32 %v1005, 0.0
    %v1036 = vmax.f32 %v1024, 0.0
    %v1037 = vmax.f32 %v989, 0.0
    %v1038 = vmax.f32 %v1008, 0.0
    %v1039 = vmax.f32 %v1027, 0.0
    %v1040 = vmax.f32 %v991, 0.0
    %v1041 = vmax.f32 %v1010, 0.0
    %v1042 = vmax.f32 %v1029, 0.0
    %v1043 = vlaneseq
    %v1044 = vshrl.u32 %v1043, 7
    %v1045 = vadd.s32 %v1044, 8
    %v1046 = vadd.s32 %v1044, 16
    %v1047 = vadd.s32 %v1044, 24
    %v1048 = vadd.s32 %v1044, 32
    %v1049 = vadd.s32 %v1044, 40
    %v1050 = vadd.s32 %v1044, 48
    %v1051 = vadd.s32 %v1044, 56
    %v1052 = vadd.s32 %v1044, 64
    %v1053 = vadd.s32 %v1044, 72
    %v1054 = vadd.s32 %v1044, 80
    %v1055 = vadd.s32 %v1044, 88
    %v1056 = vadd.s32 %v1044, 96
    %v1057 = vadd.s32 %v1044, 104
    %v1058 = vadd.s32 %v1044, 112
    %v1059 = vadd.s32 %v1044, 120
    %v1060 = vadd.s32 %v1044, 128
    %v1061 = vadd.s32 %v1044, 136
    %v1062 = vadd.s32 %v1044, 144
    %v1063 = vadd.s32 %v1044, 152
    %v1064 = vadd.s32 %v1044, 160
    %v1065 = vadd.s32 %v1044, 168
    %v1066 = vadd.s32 %v1044, 176
    %v1067 = vadd.s32 %v1044, 184
    %v1068 = vadd.s32 %v1044, 192
    %v1069 = vadd.s32 %v1044, 200
    %v1070 = vadd.s32 %v1044, 208
    %v1071 = vadd.s32 %v1044, 216
    %v1072 = vadd.s32 %v1044, 224
    %v1073 = vadd.s32 %v1044, 232
    %v1074 = vadd.s32 %v1044, 240
    %v1075 = vadd.s32 %v1044, 248
    %v1076 = vadd.s32 %v1044, 256
    %v1077 = vadd.s32 %v1044, 264
    %v1078 = vadd.s32 %v1044, 272
    %v1079 = vadd.s32 %v1044, 280
    %v1080 = vadd.s32 %v1044, 288
    %v1081 = vadd.s32 %v1044, 296
    %v1082 = vadd.s32 %v1044, 304
    %v1083 = vadd.s32 %v1044, 312
    %v1084 = vadd.s32 %v1044, 320
    %v1085 = vadd.s32 %v1044, 328
    %v1086 = vadd.s32 %v1044, 336
    %v1087 = vadd.s32 %v1044, 344
    %v1088 = vadd.s32 %v1044, 352
    %v1089 = vadd.s32 %v1044, 360
    %v1090 = vadd.s32 %v1044, 368
    %v1091 = vadd.s32 %v1044, 376
    %v1092 = vmul.u32 %v218, 32
    %vm1093 = vcmp.ge.s32.totalorder %v1044, %v1092
    %vm1094 = vcmp.ge.s32.totalorder %v1045, %v1092
    %vm1095 = vcmp.ge.s32.totalorder %v1046, %v1092
    %vm1096 = vcmp.ge.s32.totalorder %v1047, %v1092
    %vm1097 = vcmp.ge.s32.totalorder %v1048, %v1092
    %vm1098 = vcmp.ge.s32.totalorder %v1049, %v1092
    %vm1099 = vcmp.ge.s32.totalorder %v1050, %v1092
    %vm1100 = vcmp.ge.s32.totalorder %v1051, %v1092
    %vm1101 = vcmp.ge.s32.totalorder %v1052, %v1092
    %vm1102 = vcmp.ge.s32.totalorder %v1053, %v1092
    %vm1103 = vcmp.ge.s32.totalorder %v1054, %v1092
    %vm1104 = vcmp.ge.s32.totalorder %v1055, %v1092
    %vm1105 = vcmp.ge.s32.totalorder %v1056, %v1092
    %vm1106 = vcmp.ge.s32.totalorder %v1057, %v1092
    %vm1107 = vcmp.ge.s32.totalorder %v1058, %v1092
    %vm1108 = vcmp.ge.s32.totalorder %v1059, %v1092
    %vm1109 = vcmp.ge.s32.totalorder %v1060, %v1092
    %vm1110 = vcmp.ge.s32.totalorder %v1061, %v1092
    %vm1111 = vcmp.ge.s32.totalorder %v1062, %v1092
    %vm1112 = vcmp.ge.s32.totalorder %v1063, %v1092
    %vm1113 = vcmp.ge.s32.totalorder %v1064, %v1092
    %vm1114 = vcmp.ge.s32.totalorder %v1065, %v1092
    %vm1115 = vcmp.ge.s32.totalorder %v1066, %v1092
    %vm1116 = vcmp.ge.s32.totalorder %v1067, %v1092
    %vm1117 = vcmp.ge.s32.totalorder %v1068, %v1092
    %vm1118 = vcmp.ge.s32.totalorder %v1069, %v1092
    %vm1119 = vcmp.ge.s32.totalorder %v1070, %v1092
    %vm1120 = vcmp.ge.s32.totalorder %v1071, %v1092
    %vm1121 = vcmp.ge.s32.totalorder %v1072, %v1092
    %vm1122 = vcmp.ge.s32.totalorder %v1073, %v1092
    %vm1123 = vcmp.ge.s32.totalorder %v1074, %v1092
    %vm1124 = vcmp.ge.s32.totalorder %v1075, %v1092
    %vm1125 = vcmp.ge.s32.totalorder %v1076, %v1092
    %vm1126 = vcmp.ge.s32.totalorder %v1077, %v1092
    %vm1127 = vcmp.ge.s32.totalorder %v1078, %v1092
    %vm1128 = vcmp.ge.s32.totalorder %v1079, %v1092
    %vm1129 = vcmp.ge.s32.totalorder %v1080, %v1092
    %vm1130 = vcmp.ge.s32.totalorder %v1081, %v1092
    %vm1131 = vcmp.ge.s32.totalorder %v1082, %v1092
    %vm1132 = vcmp.ge.s32.totalorder %v1083, %v1092
    %vm1133 = vcmp.ge.s32.totalorder %v1084, %v1092
    %vm1134 = vcmp.ge.s32.totalorder %v1085, %v1092
    %vm1135 = vcmp.ge.s32.totalorder %v1086, %v1092
    %vm1136 = vcmp.ge.s32.totalorder %v1087, %v1092
    %vm1137 = vcmp.ge.s32.totalorder %v1088, %v1092
    %vm1138 = vcmp.ge.s32.totalorder %v1089, %v1092
    %vm1139 = vcmp.ge.s32.totalorder %v1090, %v1092
    %vm1140 = vcmp.ge.s32.totalorder %v1091, %v1092
    %v1141 = vadd.s32 %v218, 1
    %v1142 = vmul.u32 %v1141, 32
    %vm1143 = vcmp.lt.s32.totalorder %v1044, %v1142
    %vm1144 = vcmp.lt.s32.totalorder %v1045, %v1142
    %vm1145 = vcmp.lt.s32.totalorder %v1046, %v1142
    %vm1146 = vcmp.lt.s32.totalorder %v1047, %v1142
    %vm1147 = vcmp.lt.s32.totalorder %v1048, %v1142
    %vm1148 = vcmp.lt.s32.totalorder %v1049, %v1142
    %vm1149 = vcmp.lt.s32.totalorder %v1050, %v1142
    %vm1150 = vcmp.lt.s32.totalorder %v1051, %v1142
    %vm1151 = vcmp.lt.s32.totalorder %v1052, %v1142
    %vm1152 = vcmp.lt.s32.totalorder %v1053, %v1142
    %vm1153 = vcmp.lt.s32.totalorder %v1054, %v1142
    %vm1154 = vcmp.lt.s32.totalorder %v1055, %v1142
    %vm1155 = vcmp.lt.s32.totalorder %v1056, %v1142
    %vm1156 = vcmp.lt.s32.totalorder %v1057, %v1142
    %vm1157 = vcmp.lt.s32.totalorder %v1058, %v1142
    %vm1158 = vcmp.lt.s32.totalorder %v1059, %v1142
    %vm1159 = vcmp.lt.s32.totalorder %v1060, %v1142
    %vm1160 = vcmp.lt.s32.totalorder %v1061, %v1142
    %vm1161 = vcmp.lt.s32.totalorder %v1062, %v1142
    %vm1162 = vcmp.lt.s32.totalorder %v1063, %v1142
    %vm1163 = vcmp.lt.s32.totalorder %v1064, %v1142
    %vm1164 = vcmp.lt.s32.totalorder %v1065, %v1142
    %vm1165 = vcmp.lt.s32.totalorder %v1066, %v1142
    %vm1166 = vcmp.lt.s32.totalorder %v1067, %v1142
    %vm1167 = vcmp.lt.s32.totalorder %v1068, %v1142
    %vm1168 = vcmp.lt.s32.totalorder %v1069, %v1142
    %vm1169 = vcmp.lt.s32.totalorder %v1070, %v1142
    %vm1170 = vcmp.lt.s32.totalorder %v1071, %v1142
    %vm1171 = vcmp.lt.s32.totalorder %v1072, %v1142
    %vm1172 = vcmp.lt.s32.totalorder %v1073, %v1142
    %vm1173 = vcmp.lt.s32.totalorder %v1074, %v1142
    %vm1174 = vcmp.lt.s32.totalorder %v1075, %v1142
    %vm1175 = vcmp.lt.s32.totalorder %v1076, %v1142
    %vm1176 = vcmp.lt.s32.totalorder %v1077, %v1142
    %vm1177 = vcmp.lt.s32.totalorder %v1078, %v1142
    %vm1178 = vcmp.lt.s32.totalorder %v1079, %v1142
    %vm1179 = vcmp.lt.s32.totalorder %v1080, %v1142
    %vm1180 = vcmp.lt.s32.totalorder %v1081, %v1142
    %vm1181 = vcmp.lt.s32.totalorder %v1082, %v1142
    %vm1182 = vcmp.lt.s32.totalorder %v1083, %v1142
    %vm1183 = vcmp.lt.s32.totalorder %v1084, %v1142
    %vm1184 = vcmp.lt.s32.totalorder %v1085, %v1142
    %vm1185 = vcmp.lt.s32.totalorder %v1086, %v1142
    %vm1186 = vcmp.lt.s32.totalorder %v1087, %v1142
    %vm1187 = vcmp.lt.s32.totalorder %v1088, %v1142
    %vm1188 = vcmp.lt.s32.totalorder %v1089, %v1142
    %vm1189 = vcmp.lt.s32.totalorder %v1090, %v1142
    %vm1190 = vcmp.lt.s32.totalorder %v1091, %v1142
    %vm1191 = vmand %vm1093, %vm1143
    %vm1192 = vmand %vm1094, %vm1144
    %vm1193 = vmand %vm1095, %vm1145
    %vm1194 = vmand %vm1096, %vm1146
    %vm1195 = vmand %vm1097, %vm1147
    %vm1196 = vmand %vm1098, %vm1148
    %vm1197 = vmand %vm1099, %vm1149
    %vm1198 = vmand %vm1100, %vm1150
    %vm1199 = vmand %vm1101, %vm1151
    %vm1200 = vmand %vm1102, %vm1152
    %vm1201 = vmand %vm1103, %vm1153
    %vm1202 = vmand %vm1104, %vm1154
    %vm1203 = vmand %vm1105, %vm1155
    %vm1204 = vmand %vm1106, %vm1156
    %vm1205 = vmand %vm1107, %vm1157
    %vm1206 = vmand %vm1108, %vm1158
    %vm1207 = vmand %vm1109, %vm1159
    %vm1208 = vmand %vm1110, %vm1160
    %vm1209 = vmand %vm1111, %vm1161
    %vm1210 = vmand %vm1112, %vm1162
    %vm1211 = vmand %vm1113, %vm1163
    %vm1212 = vmand %vm1114, %vm1164
    %vm1213 = vmand %vm1115, %vm1165
    %vm1214 = vmand %vm1116, %vm1166
    %vm1215 = vmand %vm1117, %vm1167
    %vm1216 = vmand %vm1118, %vm1168
    %vm1217 = vmand %vm1119, %vm1169
    %vm1218 = vmand %vm1120, %vm1170
    %vm1219 = vmand %vm1121, %vm1171
    %vm1220 = vmand %vm1122, %vm1172
    %vm1221 = vmand %vm1123, %vm1173
    %vm1222 = vmand %vm1124, %vm1174
    %vm1223 = vmand %vm1125, %vm1175
    %vm1224 = vmand %vm1126, %vm1176
    %vm1225 = vmand %vm1127, %vm1177
    %vm1226 = vmand %vm1128, %vm1178
    %vm1227 = vmand %vm1129, %vm1179
    %vm1228 = vmand %vm1130, %vm1180
    %vm1229 = vmand %vm1131, %vm1181
    %vm1230 = vmand %vm1132, %vm1182
    %vm1231 = vmand %vm1133, %vm1183
    %vm1232 = vmand %vm1134, %vm1184
    %vm1233 = vmand %vm1135, %vm1185
    %vm1234 = vmand %vm1136, %vm1186
    %vm1235 = vmand %vm1137, %vm1187
    %vm1236 = vmand %vm1138, %vm1188
    %vm1237 = vmand %vm1139, %vm1189
    %vm1238 = vmand %vm1140, %vm1190
    %v1239 = vsel %vm1191, 1, 0
    %v1240 = vsel %vm1192, 1, 0
    %v1241 = vsel %vm1193, 1, 0
    %v1242 = vsel %vm1194, 1, 0
    %v1243 = vsel %vm1195, 1, 0
    %v1244 = vsel %vm1196, 1, 0
    %v1245 = vsel %vm1197, 1, 0
    %v1246 = vsel %vm1198, 1, 0
    %v1247 = vsel %vm1199, 1, 0
    %v1248 = vsel %vm1200, 1, 0
    %v1249 = vsel %vm1201, 1, 0
    %v1250 = vsel %vm1202, 1, 0
    %v1251 = vsel %vm1203, 1, 0
    %v1252 = vsel %vm1204, 1, 0
    %v1253 = vsel %vm1205, 1, 0
    %v1254 = vsel %vm1206, 1, 0
    %v1255 = vsel %vm1207, 1, 0
    %v1256 = vsel %vm1208, 1, 0
    %v1257 = vsel %vm1209, 1, 0
    %v1258 = vsel %vm1210, 1, 0
    %v1259 = vsel %vm1211, 1, 0
    %v1260 = vsel %vm1212, 1, 0
    %v1261 = vsel %vm1213, 1, 0
    %v1262 = vsel %vm1214, 1, 0
    %v1263 = vsel %vm1215, 1, 0
    %v1264 = vsel %vm1216, 1, 0
    %v1265 = vsel %vm1217, 1, 0
    %v1266 = vsel %vm1218, 1, 0
    %v1267 = vsel %vm1219, 1, 0
    %v1268 = vsel %vm1220, 1, 0
    %v1269 = vsel %vm1221, 1, 0
    %v1270 = vsel %vm1222, 1, 0
    %v1271 = vsel %vm1223, 1, 0
    %v1272 = vsel %vm1224, 1, 0
    %v1273 = vsel %vm1225, 1, 0
    %v1274 = vsel %vm1226, 1, 0
    %v1275 = vsel %vm1227, 1, 0
    %v1276 = vsel %vm1228, 1, 0
    %v1277 = vsel %vm1229, 1, 0
    %v1278 = vsel %vm1230, 1, 0
    %v1279 = vsel %vm1231, 1, 0
    %v1280 = vsel %vm1232, 1, 0
    %v1281 = vsel %vm1233, 1, 0
    %v1282 = vsel %vm1234, 1, 0
    %v1283 = vsel %vm1235, 1, 0
    %v1284 = vsel %vm1236, 1, 0
    %v1285 = vsel %vm1237, 1, 0
    %v1286 = vsel %vm1238, 1, 0
    %v1287 = vcvt.s32.f32 %v1239
    %v1288 = vcvt.s32.f32 %v1240
    %v1289 = vcvt.s32.f32 %v1241
    %v1290 = vcvt.s32.f32 %v1242
    %v1291 = vcvt.s32.f32 %v1243
    %v1292 = vcvt.s32.f32 %v1244
    %v1293 = vcvt.s32.f32 %v1245
    %v1294 = vcvt.s32.f32 %v1246
    %v1295 = vcvt.s32.f32 %v1247
    %v1296 = vcvt.s32.f32 %v1248
    %v1297 = vcvt.s32.f32 %v1249
    %v1298 = vcvt.s32.f32 %v1250
    %v1299 = vcvt.s32.f32 %v1251
    %v1300 = vcvt.s32.f32 %v1252
    %v1301 = vcvt.s32.f32 %v1253
    %v1302 = vcvt.s32.f32 %v1254
    %v1303 = vcvt.s32.f32 %v1255
    %v1304 = vcvt.s32.f32 %v1256
    %v1305 = vcvt.s32.f32 %v1257
    %v1306 = vcvt.s32.f32 %v1258
    %v1307 = vcvt.s32.f32 %v1259
    %v1308 = vcvt.s32.f32 %v1260
    %v1309 = vcvt.s32.f32 %v1261
    %v1310 = vcvt.s32.f32 %v1262
    %v1311 = vcvt.s32.f32 %v1263
    %v1312 = vcvt.s32.f32 %v1264
    %v1313 = vcvt.s32.f32 %v1265
    %v1314 = vcvt.s32.f32 %v1266
    %v1315 = vcvt.s32.f32 %v1267
    %v1316 = vcvt.s32.f32 %v1268
    %v1317 = vcvt.s32.f32 %v1269
    %v1318 = vcvt.s32.f32 %v1270
    %v1319 = vcvt.s32.f32 %v1271
    %v1320 = vcvt.s32.f32 %v1272
    %v1321 = vcvt.s32.f32 %v1273
    %v1322 = vcvt.s32.f32 %v1274
    %v1323 = vcvt.s32.f32 %v1275
    %v1324 = vcvt.s32.f32 %v1276
    %v1325 = vcvt.s32.f32 %v1277
    %v1326 = vcvt.s32.f32 %v1278
    %v1327 = vcvt.s32.f32 %v1279
    %v1328 = vcvt.s32.f32 %v1280
    %v1329 = vcvt.s32.f32 %v1281
    %v1330 = vcvt.s32.f32 %v1282
    %v1331 = vcvt.s32.f32 %v1283
    %v1332 = vcvt.s32.f32 %v1284
    %v1333 = vcvt.s32.f32 %v1285
    %v1334 = vcvt.s32.f32 %v1286
    %1339 = vrot.lane.b32.xlu0 %v1031, 32
    %v1340 = vpop.permute.xlu0 %1339
    %1341 = vrot.lane.b32.xlu0 %v1034, 32
    %v1342 = vpop.permute.xlu0 %1341
    %1343 = vrot.lane.b32.xlu0 %v1037, 32
    %v1344 = vpop.permute.xlu0 %1343
    %1345 = vrot.lane.b32.xlu0 %v1040, 32
    %v1346 = vpop.permute.xlu0 %1345
    %1351 = vrot.lane.b32.xlu0 %v1031, 64
    %v1352 = vpop.permute.xlu0 %1351
    %1353 = vrot.lane.b32.xlu0 %v1034, 64
    %v1354 = vpop.permute.xlu0 %1353
    %1355 = vrot.lane.b32.xlu0 %v1037, 64
    %v1356 = vpop.permute.xlu0 %1355
    %1357 = vrot.lane.b32.xlu0 %v1040, 64
    %v1358 = vpop.permute.xlu0 %1357
    %1363 = vrot.lane.b32.xlu0 %v1031, 96
    %v1364 = vpop.permute.xlu0 %1363
    %1365 = vrot.lane.b32.xlu0 %v1034, 96
    %v1366 = vpop.permute.xlu0 %1365
    %1367 = vrot.lane.b32.xlu0 %v1037, 96
    %v1368 = vpop.permute.xlu0 %1367
    %1369 = vrot.lane.b32.xlu0 %v1040, 96
    %v1370 = vpop.permute.xlu0 %1369
    %v1375 = vsel %vm30, %v1031, %v1340
    %v1376 = vsel %vm30, %v1034, %v1342
    %v1377 = vsel %vm30, %v1037, %v1344
    %v1378 = vsel %vm30, %v1040, %v1346
    %v1379 = vsel %vm923, %v1375, %v1352
    %v1380 = vsel %vm923, %v1376, %v1354
    %v1381 = vsel %vm923, %v1377, %v1356
    %v1382 = vsel %vm923, %v1378, %v1358
    %v1383 = vsel %vm928, %v1379, %v1364
    %v1384 = vsel %vm928, %v1380, %v1366
    %v1385 = vsel %vm928, %v1381, %v1368
    %v1386 = vsel %vm928, %v1382, %v1370
    %v1387 = vmul.f32 %v1031, %v1383
    %v1388 = vmul.f32 %v1032, %v1383
    %v1389 = vmul.f32 %v1033, %v1383
    %v1390 = vmul.f32 %v1034, %v1384
    %v1391 = vmul.f32 %v1035, %v1384
    %v1392 = vmul.f32 %v1036, %v1384
    %v1393 = vmul.f32 %v1037, %v1385
    %v1394 = vmul.f32 %v1038, %v1385
    %v1395 = vmul.f32 %v1039, %v1385
    %v1396 = vmul.f32 %v1040, %v1386
    %v1397 = vmul.f32 %v1041, %v1386
    %v1398 = vmul.f32 %v1042, %v1386
    %1399 = vmatpush.msra.mxu0 %v1302
    %1400 = vmatpush.msra.mxu0 %v1301
    %1401 = vmatpush.msra.mxu0 %v1300
    %1402 = vmatpush.msra.mxu0 %v1299
    %1403 = vmatpush.msra.mxu0 %v1298
    %1404 = vmatpush.msra.mxu0 %v1297
    %1405 = vmatpush.msra.mxu0 %v1296
    %1406 = vmatpush.msra.mxu0 %v1295
    %1407 = vmatpush.msra.mxu0 %v1294
    %1408 = vmatpush.msra.mxu0 %v1293
    %1409 = vmatpush.msra.mxu0 %v1292
    %1410 = vmatpush.msra.mxu0 %v1291
    %1411 = vmatpush.msra.mxu0 %v1290
    %1412 = vmatpush.msra.mxu0 %v1289
    %1413 = vmatpush.msra.mxu0 %v1288
    %1414 = vmatpush.msra.mxu0 %v1287
    %1415 = vmatmul.f32.gmra.mxu0 %v1387
    %v1416 = vpop.f32.mrf.mxu0
    %v1417 = vadd.f32 0.0, %v1416
    %1418 = vmatmul.f32.gmra.mxu0 %v1390
    %v1419 = vpop.f32.mrf.mxu0
    %v1420 = vadd.f32 0.0, %v1419
    %1421 = vmatmul.f32.gmra.mxu0 %v1393
    %v1422 = vpop.f32.mrf.mxu0
    %v1423 = vadd.f32 0.0, %v1422
    %1424 = vmatmul.f32.gmra.mxu0 %v1396
    %v1425 = vpop.f32.mrf.mxu0
    %v1426 = vadd.f32 0.0, %v1425
    %1427 = vdwg.mxu0
    %1428 = vmatpush.msra.mxu0 %v1318
    %1429 = vmatpush.msra.mxu0 %v1317
    %1430 = vmatpush.msra.mxu0 %v1316
    %1431 = vmatpush.msra.mxu0 %v1315
    %1432 = vmatpush.msra.mxu0 %v1314
    %1433 = vmatpush.msra.mxu0 %v1313
    %1434 = vmatpush.msra.mxu0 %v1312
    %1435 = vmatpush.msra.mxu0 %v1311
    %1436 = vmatpush.msra.mxu0 %v1310
    %1437 = vmatpush.msra.mxu0 %v1309
    %1438 = vmatpush.msra.mxu0 %v1308
    %1439 = vmatpush.msra.mxu0 %v1307
    %1440 = vmatpush.msra.mxu0 %v1306
    %1441 = vmatpush.msra.mxu0 %v1305
    %1442 = vmatpush.msra.mxu0 %v1304
    %1443 = vmatpush.msra.mxu0 %v1303
    %1444 = vmatmul.f32.gmra.mxu0 %v1388
    %v1445 = vpop.f32.mrf.mxu0
    %v1446 = vadd.f32 %v1417, %v1445
    %1447 = vmatmul.f32.gmra.mxu0 %v1391
    %v1448 = vpop.f32.mrf.mxu0
    %v1449 = vadd.f32 %v1420, %v1448
    %1450 = vmatmul.f32.gmra.mxu0 %v1394
    %v1451 = vpop.f32.mrf.mxu0
    %v1452 = vadd.f32 %v1423, %v1451
    %1453 = vmatmul.f32.gmra.mxu0 %v1397
    %v1454 = vpop.f32.mrf.mxu0
    %v1455 = vadd.f32 %v1426, %v1454
    %1456 = vdwg.mxu0
    %1457 = vmatpush.msra.mxu0 %v1334
    %1458 = vmatpush.msra.mxu0 %v1333
    %1459 = vmatpush.msra.mxu0 %v1332
    %1460 = vmatpush.msra.mxu0 %v1331
    %1461 = vmatpush.msra.mxu0 %v1330
    %1462 = vmatpush.msra.mxu0 %v1329
    %1463 = vmatpush.msra.mxu0 %v1328
    %1464 = vmatpush.msra.mxu0 %v1327
    %1465 = vmatpush.msra.mxu0 %v1326
    %1466 = vmatpush.msra.mxu0 %v1325
    %1467 = vmatpush.msra.mxu0 %v1324
    %1468 = vmatpush.msra.mxu0 %v1323
    %1469 = vmatpush.msra.mxu0 %v1322
    %1470 = vmatpush.msra.mxu0 %v1321
    %1471 = vmatpush.msra.mxu0 %v1320
    %1472 = vmatpush.msra.mxu0 %v1319
    %1473 = vmatmul.f32.gmra.mxu0 %v1389
    %v1474 = vpop.f32.mrf.mxu0
    %v1475 = vadd.f32 %v1446, %v1474
    %1476 = vmatmul.f32.gmra.mxu0 %v1392
    %v1477 = vpop.f32.mrf.mxu0
    %v1478 = vadd.f32 %v1449, %v1477
    %1479 = vmatmul.f32.gmra.mxu0 %v1395
    %v1480 = vpop.f32.mrf.mxu0
    %v1481 = vadd.f32 %v1452, %v1480
    %1482 = vmatmul.f32.gmra.mxu0 %v1398
    %v1483 = vpop.f32.mrf.mxu0
    %v1484 = vadd.f32 %v1455, %v1483
    %1485 = vdwg.mxu0
    %v1486 = vmul.f32 %v1031, %v1031
    %v1487 = vmul.f32 %v1032, %v1032
    %v1488 = vmul.f32 %v1033, %v1033
    %v1489 = vmul.f32 %v1034, %v1034
    %v1490 = vmul.f32 %v1035, %v1035
    %v1491 = vmul.f32 %v1036, %v1036
    %v1492 = vmul.f32 %v1037, %v1037
    %v1493 = vmul.f32 %v1038, %v1038
    %v1494 = vmul.f32 %v1039, %v1039
    %v1495 = vmul.f32 %v1040, %v1040
    %v1496 = vmul.f32 %v1041, %v1041
    %v1497 = vmul.f32 %v1042, %v1042
    %1498 = vmatpush.msra.mxu0 %v1302
    %1499 = vmatpush.msra.mxu0 %v1301
    %1500 = vmatpush.msra.mxu0 %v1300
    %1501 = vmatpush.msra.mxu0 %v1299
    %1502 = vmatpush.msra.mxu0 %v1298
    %1503 = vmatpush.msra.mxu0 %v1297
    %1504 = vmatpush.msra.mxu0 %v1296
    %1505 = vmatpush.msra.mxu0 %v1295
    %1506 = vmatpush.msra.mxu0 %v1294
    %1507 = vmatpush.msra.mxu0 %v1293
    %1508 = vmatpush.msra.mxu0 %v1292
    %1509 = vmatpush.msra.mxu0 %v1291
    %1510 = vmatpush.msra.mxu0 %v1290
    %1511 = vmatpush.msra.mxu0 %v1289
    %1512 = vmatpush.msra.mxu0 %v1288
    %1513 = vmatpush.msra.mxu0 %v1287
    %1514 = vmatmul.f32.gmra.mxu0 %v1486
    %v1515 = vpop.f32.mrf.mxu0
    %v1516 = vadd.f32 3.2e-07, %v1515
    %1517 = vmatmul.f32.gmra.mxu0 %v1489
    %v1518 = vpop.f32.mrf.mxu0
    %v1519 = vadd.f32 3.2e-07, %v1518
    %1520 = vmatmul.f32.gmra.mxu0 %v1492
    %v1521 = vpop.f32.mrf.mxu0
    %v1522 = vadd.f32 3.2e-07, %v1521
    %1523 = vmatmul.f32.gmra.mxu0 %v1495
    %v1524 = vpop.f32.mrf.mxu0
    %v1525 = vadd.f32 3.2e-07, %v1524
    %1526 = vdwg.mxu0
    %1527 = vmatpush.msra.mxu0 %v1318
    %1528 = vmatpush.msra.mxu0 %v1317
    %1529 = vmatpush.msra.mxu0 %v1316
    %1530 = vmatpush.msra.mxu0 %v1315
    %1531 = vmatpush.msra.mxu0 %v1314
    %1532 = vmatpush.msra.mxu0 %v1313
    %1533 = vmatpush.msra.mxu0 %v1312
    %1534 = vmatpush.msra.mxu0 %v1311
    %1535 = vmatpush.msra.mxu0 %v1310
    %1536 = vmatpush.msra.mxu0 %v1309
    %1537 = vmatpush.msra.mxu0 %v1308
    %1538 = vmatpush.msra.mxu0 %v1307
    %1539 = vmatpush.msra.mxu0 %v1306
    %1540 = vmatpush.msra.mxu0 %v1305
    %1541 = vmatpush.msra.mxu0 %v1304
    %1542 = vmatpush.msra.mxu0 %v1303
    %1543 = vmatmul.f32.gmra.mxu0 %v1487
    %v1544 = vpop.f32.mrf.mxu0
    %v1545 = vadd.f32 %v1516, %v1544
    %1546 = vmatmul.f32.gmra.mxu0 %v1490
    %v1547 = vpop.f32.mrf.mxu0
    %v1548 = vadd.f32 %v1519, %v1547
    %1549 = vmatmul.f32.gmra.mxu0 %v1493
    %v1550 = vpop.f32.mrf.mxu0
    %v1551 = vadd.f32 %v1522, %v1550
    %1552 = vmatmul.f32.gmra.mxu0 %v1496
    %v1553 = vpop.f32.mrf.mxu0
    %v1554 = vadd.f32 %v1525, %v1553
    %1555 = vdwg.mxu0
    %1556 = vmatpush.msra.mxu0 %v1334
    %1557 = vmatpush.msra.mxu0 %v1333
    %1558 = vmatpush.msra.mxu0 %v1332
    %1559 = vmatpush.msra.mxu0 %v1331
    %1560 = vmatpush.msra.mxu0 %v1330
    %1561 = vmatpush.msra.mxu0 %v1329
    %1562 = vmatpush.msra.mxu0 %v1328
    %1563 = vmatpush.msra.mxu0 %v1327
    %1564 = vmatpush.msra.mxu0 %v1326
    %1565 = vmatpush.msra.mxu0 %v1325
    %1566 = vmatpush.msra.mxu0 %v1324
    %1567 = vmatpush.msra.mxu0 %v1323
    %1568 = vmatpush.msra.mxu0 %v1322
    %1569 = vmatpush.msra.mxu0 %v1321
    %1570 = vmatpush.msra.mxu0 %v1320
    %1571 = vmatpush.msra.mxu0 %v1319
    %1572 = vmatmul.f32.gmra.mxu0 %v1488
    %v1573 = vpop.f32.mrf.mxu0
    %v1574 = vadd.f32 %v1545, %v1573
    %1575 = vmatmul.f32.gmra.mxu0 %v1491
    %v1576 = vpop.f32.mrf.mxu0
    %v1577 = vadd.f32 %v1548, %v1576
    %1578 = vmatmul.f32.gmra.mxu0 %v1494
    %v1579 = vpop.f32.mrf.mxu0
    %v1580 = vadd.f32 %v1551, %v1579
    %1581 = vmatmul.f32.gmra.mxu0 %v1497
    %v1582 = vpop.f32.mrf.mxu0
    %v1583 = vadd.f32 %v1554, %v1582
    %1584 = vdwg.mxu0
    %v1585 = vrsqrt.pop %v1574
    %v1586 = vmul.f32 %v1585, %v1574
    %v1587 = vmul.f32 %v1586, %v1585
    %v1588 = vmul.f32 0.5, %v1587
    %v1589 = vsub.f32 1.5, %v1588
    %v1590 = vmul.f32 %v1585, %v1589
    %vm1591 = vweird.f32 %v1574
    %vm1592 = vweird.f32 %v1585
    %vm1593 = vmor %vm1591, %vm1592
    %v1594 = vsel %vm1593, %v1585, %v1590
    %v1595 = vrsqrt.pop %v1577
    %v1596 = vmul.f32 %v1595, %v1577
    %v1597 = vmul.f32 %v1596, %v1595
    %v1598 = vmul.f32 0.5, %v1597
    %v1599 = vsub.f32 1.5, %v1598
    %v1600 = vmul.f32 %v1595, %v1599
    %vm1601 = vweird.f32 %v1577
    %vm1602 = vweird.f32 %v1595
    %vm1603 = vmor %vm1601, %vm1602
    %v1604 = vsel %vm1603, %v1595, %v1600
    %v1605 = vrsqrt.pop %v1580
    %v1606 = vmul.f32 %v1605, %v1580
    %v1607 = vmul.f32 %v1606, %v1605
    %v1608 = vmul.f32 0.5, %v1607
    %v1609 = vsub.f32 1.5, %v1608
    %v1610 = vmul.f32 %v1605, %v1609
    %vm1611 = vweird.f32 %v1580
    %vm1612 = vweird.f32 %v1605
    %vm1613 = vmor %vm1611, %vm1612
    %v1614 = vsel %vm1613, %v1605, %v1610
    %v1615 = vrsqrt.pop %v1583
    %v1616 = vmul.f32 %v1615, %v1583
    %v1617 = vmul.f32 %v1616, %v1615
    %v1618 = vmul.f32 0.5, %v1617
    %v1619 = vsub.f32 1.5, %v1618
    %v1620 = vmul.f32 %v1615, %v1619
    %vm1621 = vweird.f32 %v1583
    %vm1622 = vweird.f32 %v1615
    %vm1623 = vmor %vm1621, %vm1622
    %v1624 = vsel %vm1623, %v1615, %v1620
    %v1625 = vmul.f32 %v1475, %v1594
    %v1626 = vmul.f32 %v1478, %v1604
    %v1627 = vmul.f32 %v1481, %v1614
    %v1628 = vmul.f32 %v1484, %v1624
    %1633 = vrot.lane.b32.xlu0 %v1625, 127
    %v1634 = vpop.permute.xlu0 %1633
    %1635 = vrot.lane.b32.xlu0 %v1626, 127
    %v1636 = vpop.permute.xlu0 %1635
    %1637 = vrot.lane.b32.xlu0 %v1627, 127
    %v1638 = vpop.permute.xlu0 %1637
    %1639 = vrot.lane.b32.xlu0 %v1628, 127
    %v1640 = vpop.permute.xlu0 %1639
    %vm1645 = vcmask 80896
    %v1646 = vsel %vm1645, %v1634, 0.0
    %1647 = vadd.xlane.f32.xlu0 %v1646
    %v1648 = vpop.xlane.xlu0 %1647
    %v1649 = vsel %vm1645, %v1636, 0.0
    %1650 = vadd.xlane.f32.xlu0 %v1649
    %v1651 = vpop.xlane.xlu0 %1650
    %v1652 = vsel %vm1645, %v1638, 0.0
    %1653 = vadd.xlane.f32.xlu0 %v1652
    %v1654 = vpop.xlane.xlu0 %1653
    %v1655 = vsel %vm1645, %v1640, 0.0
    %1656 = vadd.xlane.f32.xlu0 %v1655
    %v1657 = vpop.xlane.xlu0 %1656
    %v1658 = vmul.f32 %v1648, %v1594
    %v1659 = vmul.f32 %v1651, %v1604
    %v1660 = vmul.f32 %v1654, %v1614
    %v1661 = vmul.f32 %v1657, %v1624
    %v1662 = vmul.f32 %v1658, 0.1
    %v1663 = vmul.f32 %v1659, 0.1
    %v1664 = vmul.f32 %v1660, 0.1
    %v1665 = vmul.f32 %v1661, 0.1
    %v1666 = vpack.c.bf16 %v1034, %v1031
    %v1667 = vpack.c.bf16 %v1040, %v1037
    %v1669 = vsel %vm30, %v1666, 0
    %v1672 = vsel %vm30, %v1667, 0
    %1674 = vmatpush.bf16.xpose.msra.mxu0 0
    %1675 = vmatpush.bf16.xpose.msra.mxu0 0
    %1676 = vmatpush.bf16.xpose.msra.mxu0 0
    %1677 = vmatpush.bf16.xpose.msra.mxu0 0
    %1678 = vmatpush.bf16.xpose.msra.mxu0 0
    %1679 = vmatpush.bf16.xpose.msra.mxu0 0
    %1680 = vmatpush.bf16.xpose.msra.mxu0 %v1672
    %1681 = vmatpush.bf16.xpose.msra.mxu0 %v1669
    %1682 = vmatmul.bf16.gmra.mxu0 %v1669
    %v1683 = vpop.f32.mrf.mxu0
    %v1684 = vadd.f32 0.0, %v1683
    %v1685 = vpop.f32.mrf.mxu0
    %v1686 = vadd.f32 0.0, %v1685
    %1687 = vmatmul.bf16.gmra.mxu0 %v1672
    %v1688 = vpop.f32.mrf.mxu0
    %v1689 = vadd.f32 0.0, %v1688
    %v1690 = vpop.f32.mrf.mxu0
    %v1691 = vadd.f32 0.0, %v1690
    %1692 = vdwg.mxu0
    %1693 = vxpose.xlu0.b32.start [1/16] %v1594, 128
    %1694 = vxpose.xlu0.b32.cont [2/16] %v1604, 128
    %1695 = vxpose.xlu0.b32.cont [3/16] %v1614, 128
    %1696 = vxpose.xlu0.b32.cont [4/16] %v1624, 128
    %1697 = vxpose.xlu0.b32.cont [5/16] 0.0, 128
    %1698 = vxpose.xlu0.b32.cont [6/16] 0.0, 128
    %1699 = vxpose.xlu0.b32.cont [7/16] 0.0, 128
    %1700 = vxpose.xlu0.b32.cont [8/16] 0.0, 128
    %1701 = vxpose.xlu0.b32.cont [9/16] 0.0, 128
    %1702 = vxpose.xlu0.b32.cont [10/16] 0.0, 128
    %1703 = vxpose.xlu0.b32.cont [11/16] 0.0, 128
    %1704 = vxpose.xlu0.b32.cont [12/16] 0.0, 128
    %1705 = vxpose.xlu0.b32.cont [13/16] 0.0, 128
    %1706 = vxpose.xlu0.b32.cont [14/16] 0.0, 128
    %1707 = vxpose.xlu0.b32.cont [15/16] 0.0, 128
    %1708 = vxpose.xlu0.b32.end [16/16] 0.0, 128
    %v1709 = vpop.trf.xlu0
    %v1710 = vpop.trf.xlu0
    %v1711 = vpop.trf.xlu0
    %v1712 = vpop.trf.xlu0
    %v1713 = vpop.trf.xlu0
    %v1714 = vpop.trf.xlu0
    %v1715 = vpop.trf.xlu0
    %v1716 = vpop.trf.xlu0
    %v1717 = vpop.trf.xlu0
    %v1718 = vpop.trf.xlu0
    %v1719 = vpop.trf.xlu0
    %v1720 = vpop.trf.xlu0
    %v1721 = vpop.trf.xlu0
    %v1722 = vpop.trf.xlu0
    %v1723 = vpop.trf.xlu0
    %v1724 = vpop.trf.xlu0
    %1726 = vset.pattern.permute.xlu0 0
    %1727 = vperm.xlu0 %1726, %v1594
    %v1728 = vpop.permute.xlu0 %1727
    %1731 = vset.pattern.permute.xlu0 0
    %1732 = vperm.xlu0 %1731, %v1604
    %v1733 = vpop.permute.xlu0 %1732
    %1736 = vset.pattern.permute.xlu0 0
    %1737 = vperm.xlu0 %1736, %v1614
    %v1738 = vpop.permute.xlu0 %1737
    %1741 = vset.pattern.permute.xlu0 0
    %1742 = vperm.xlu0 %1741, %v1624
    %v1743 = vpop.permute.xlu0 %1742
    %v1745 = vperm.slane %v1709, 0
    %v1746 = vmul.f32 %v1728, %v1745
    %v1747 = vmul.f32 %v1733, %v1745
    %v1748 = vmul.f32 %v1738, %v1745
    %v1749 = vmul.f32 %v1743, %v1745
    %v1750 = vmul.f32 %v1684, %v1746
    %v1751 = vmul.f32 %v1686, %v1747
    %v1752 = vmul.f32 %v1689, %v1748
    %v1753 = vmul.f32 %v1691, %v1749
    %1754 = vxpose.xlu0.b32.start [1/16] %v1662, 128
    %1755 = vxpose.xlu0.b32.cont [2/16] %v1663, 128
    %1756 = vxpose.xlu0.b32.cont [3/16] %v1664, 128
    %1757 = vxpose.xlu0.b32.cont [4/16] %v1665, 128
    %1758 = vxpose.xlu0.b32.cont [5/16] 0.0, 128
    %1759 = vxpose.xlu0.b32.cont [6/16] 0.0, 128
    %1760 = vxpose.xlu0.b32.cont [7/16] 0.0, 128
    %1761 = vxpose.xlu0.b32.cont [8/16] 0.0, 128
    %1762 = vxpose.xlu0.b32.cont [9/16] 0.0, 128
    %1763 = vxpose.xlu0.b32.cont [10/16] 0.0, 128
    %1764 = vxpose.xlu0.b32.cont [11/16] 0.0, 128
    %1765 = vxpose.xlu0.b32.cont [12/16] 0.0, 128
    %1766 = vxpose.xlu0.b32.cont [13/16] 0.0, 128
    %1767 = vxpose.xlu0.b32.cont [14/16] 0.0, 128
    %1768 = vxpose.xlu0.b32.cont [15/16] 0.0, 128
    %1769 = vxpose.xlu0.b32.end [16/16] 0.0, 128
    %v1770 = vpop.trf.xlu0
    %v1771 = vpop.trf.xlu0
    %v1772 = vpop.trf.xlu0
    %v1773 = vpop.trf.xlu0
    %v1774 = vpop.trf.xlu0
    %v1775 = vpop.trf.xlu0
    %v1776 = vpop.trf.xlu0
    %v1777 = vpop.trf.xlu0
    %v1778 = vpop.trf.xlu0
    %v1779 = vpop.trf.xlu0
    %v1780 = vpop.trf.xlu0
    %v1781 = vpop.trf.xlu0
    %v1782 = vpop.trf.xlu0
    %v1783 = vpop.trf.xlu0
    %v1784 = vpop.trf.xlu0
    %v1785 = vpop.trf.xlu0
    %v1786 = vperm.slane %v1770, 0
    %v1787 = vsub.f32 %v1786, %v1750
    %v1788 = vsub.f32 %v1786, %v1751
    %v1789 = vsub.f32 %v1786, %v1752
    %v1790 = vsub.f32 %v1786, %v1753
    %vm1791 = vcmp.lt.f32.partialorder %v1787, 0.0
    %vm1792 = vcmp.lt.f32.partialorder %v1788, 0.0
    %vm1793 = vcmp.lt.f32.partialorder %v1789, 0.0
    %vm1794 = vcmp.lt.f32.partialorder %v1790, 0.0
    %vm1795 = vcmp.gt.f32.partialorder %v160, 0.0
    %vm1796 = vcmp.gt.f32.partialorder %v161, 0.0
    %vm1797 = vcmp.gt.f32.partialorder %v162, 0.0
    %vm1798 = vcmp.gt.f32.partialorder %v163, 0.0
    %v1799 = vsel %vm1795, 1.0, -9e+15
    %v1800 = vsel %vm1796, 1.0, -9e+15
    %v1801 = vsel %vm1797, 1.0, -9e+15
    %v1802 = vsel %vm1798, 1.0, -9e+15
    %v1803 = vsel %vm1791, %v1799, -9e+15
    %v1804 = vsel %vm1792, %v1800, -9e+15
    %v1805 = vsel %vm1793, %v1801, -9e+15
    %v1806 = vsel %vm1794, %v1802, -9e+15
    %v1807 = vsel %vm30, %v1803, 0.0
    %1808 = vadd.xlane.f32.xlu0 %v1807
    %v1809 = vpop.xlane.xlu0 %1808
    %v1810 = vsel %vm30, %v1804, 0.0
    %1811 = vadd.xlane.f32.xlu0 %v1810
    %v1812 = vpop.xlane.xlu0 %1811
    %v1813 = vsel %vm30, %v1805, 0.0
    %1814 = vadd.xlane.f32.xlu0 %v1813
    %v1815 = vpop.xlane.xlu0 %1814
    %v1816 = vsel %vm30, %v1806, 0.0
    %1817 = vadd.xlane.f32.xlu0 %v1816
    %v1818 = vpop.xlane.xlu0 %1817
    %v1819 = vmax.f32 %v1809, 0.0
    %v1820 = vmax.f32 %v1812, 0.0
    %v1821 = vmax.f32 %v1815, 0.0
    %v1822 = vmax.f32 %v1818, 0.0
    %v1823 = vadd.f32 %v1819, 2.2204e-16
    %v1824 = vadd.f32 %v1820, 2.2204e-16
    %v1825 = vadd.f32 %v1821, 2.2204e-16
    %v1826 = vadd.f32 %v1822, 2.2204e-16
    %v1827 = vrsqrt.pop %v1823
    %v1828 = vmul.f32 %v1827, %v1823
    %v1829 = vmul.f32 %v1828, %v1827
    %v1830 = vmul.f32 0.5, %v1829
    %v1831 = vsub.f32 1.5, %v1830
    %v1832 = vmul.f32 %v1827, %v1831
    %vm1833 = vweird.f32 %v1823
    %vm1834 = vweird.f32 %v1827
    %vm1835 = vmor %vm1833, %vm1834
    %v1836 = vsel %vm1835, %v1827, %v1832
    %v1837 = vrsqrt.pop %v1824
    %v1838 = vmul.f32 %v1837, %v1824
    %v1839 = vmul.f32 %v1838, %v1837
    %v1840 = vmul.f32 0.5, %v1839
    %v1841 = vsub.f32 1.5, %v1840
    %v1842 = vmul.f32 %v1837, %v1841
    %vm1843 = vweird.f32 %v1824
    %vm1844 = vweird.f32 %v1837
    %vm1845 = vmor %vm1843, %vm1844
    %v1846 = vsel %vm1845, %v1837, %v1842
    %v1847 = vrsqrt.pop %v1825
    %v1848 = vmul.f32 %v1847, %v1825
    %v1849 = vmul.f32 %v1848, %v1847
    %v1850 = vmul.f32 0.5, %v1849
    %v1851 = vsub.f32 1.5, %v1850
    %v1852 = vmul.f32 %v1847, %v1851
    %vm1853 = vweird.f32 %v1825
    %vm1854 = vweird.f32 %v1847
    %vm1855 = vmor %vm1853, %vm1854
    %v1856 = vsel %vm1855, %v1847, %v1852
    %v1857 = vrsqrt.pop %v1826
    %v1858 = vmul.f32 %v1857, %v1826
    %v1859 = vmul.f32 %v1858, %v1857
    %v1860 = vmul.f32 0.5, %v1859
    %v1861 = vsub.f32 1.5, %v1860
    %v1862 = vmul.f32 %v1857, %v1861
    %vm1863 = vweird.f32 %v1826
    %vm1864 = vweird.f32 %v1857
    %vm1865 = vmor %vm1863, %vm1864
    %v1866 = vsel %vm1865, %v1857, %v1862
    %v1867 = vmul.f32 %v1836, %v1803
    %v1868 = vmul.f32 %v1846, %v1804
    %v1869 = vmul.f32 %v1856, %v1805
    %v1870 = vmul.f32 %v1866, %v1806
    %1871 = vxpose.xlu0.b32.start [1/16] %v1836, 128
    %1872 = vxpose.xlu0.b32.cont [2/16] %v1846, 128
    %1873 = vxpose.xlu0.b32.cont [3/16] %v1856, 128
    %1874 = vxpose.xlu0.b32.cont [4/16] %v1866, 128
    %1875 = vxpose.xlu0.b32.cont [5/16] 0.0, 128
    %1876 = vxpose.xlu0.b32.cont [6/16] 0.0, 128
    %1877 = vxpose.xlu0.b32.cont [7/16] 0.0, 128
    %1878 = vxpose.xlu0.b32.cont [8/16] 0.0, 128
    %1879 = vxpose.xlu0.b32.cont [9/16] 0.0, 128
    %1880 = vxpose.xlu0.b32.cont [10/16] 0.0, 128
    %1881 = vxpose.xlu0.b32.cont [11/16] 0.0, 128
    %1882 = vxpose.xlu0.b32.cont [12/16] 0.0, 128
    %1883 = vxpose.xlu0.b32.cont [13/16] 0.0, 128
    %1884 = vxpose.xlu0.b32.cont [14/16] 0.0, 128
    %1885 = vxpose.xlu0.b32.cont [15/16] 0.0, 128
    %1886 = vxpose.xlu0.b32.end [16/16] 0.0, 128
    %v1887 = vpop.trf.xlu0
    %v1888 = vpop.trf.xlu0
    %v1889 = vpop.trf.xlu0
    %v1890 = vpop.trf.xlu0
    %v1891 = vpop.trf.xlu0
    %v1892 = vpop.trf.xlu0
    %v1893 = vpop.trf.xlu0
    %v1894 = vpop.trf.xlu0
    %v1895 = vpop.trf.xlu0
    %v1896 = vpop.trf.xlu0
    %v1897 = vpop.trf.xlu0
    %v1898 = vpop.trf.xlu0
    %v1899 = vpop.trf.xlu0
    %v1900 = vpop.trf.xlu0
    %v1901 = vpop.trf.xlu0
    %v1902 = vpop.trf.xlu0
    %v1903 = vperm.slane %v1887, 0
    %v1904 = vmul.f32 %v1867, %v1903
    %v1905 = vmul.f32 %v1868, %v1903
    %v1906 = vmul.f32 %v1869, %v1903
    %v1907 = vmul.f32 %v1870, %v1903
    %1908 = vst.msk [vmem:[#allocation2] sm:$0xff] %vm30, %v1904
    %1909 = vst.msk [vmem:[#allocation2 + $0x8] sm:$0xff] %vm30, %v1905
    %1910 = vst.msk [vmem:[#allocation2 + $0x10] sm:$0xff] %vm30, %v1906
    %1911 = vst.msk [vmem:[#allocation2 + $0x18] sm:$0xff] %vm30, %v1907
    // Predicated region
    $region22: #{_natsumi_device.1} parent=1 // pred_check
      _
    $region23: #{_natsumi_device.1} parent=1 // pred_check_branch
      %1913 = sbr.rel (0) target = $region25
    $region24: #{_natsumi_device.1} parent=1 // pred_region
      %1915 = vsyncadd [#allocation3], 0
      %s1916 = sshll.u32 [#allocation2], 4
      %s1917 = int_to_ptr.vmem [resolvable:$true] %s1916
      %s1918 = sshll.u32 %s5, 4
      %s1919 = int_to_ptr.hbm [resolvable:$true] %s1918
      %1924 = dma.vmem_to_hbm [thread:$0]  %s1917, 512, %s1919, [#allocation3], 128, 128, 8
    $region25: #{_natsumi_device.1} parent=1 // pred_fallthru
      _
    // Predicated region
    $region26: #{_natsumi_device.1} parent=1 // pred_check
      _
    $region27: #{_natsumi_device.1} parent=1 // pred_check_branch
      %1926 = sbr.rel (0) target = $region29
    $region28: #{_natsumi_device.1} parent=1 // pred_region
      %1928 = dma.done [#allocation3], 512
    $region29: #{_natsumi_device.1} parent=1 // pred_fallthru
      _
    %1929 = vsyncpa [#allocation3], 1

</llo_original>
